<compile_context>
chip_gen: v5e
topology: v5e:2x2
jax: 0.10.0
libtpu: 0.0.40
codegen_flags: <defaults>
</compile_context>

<pallas_src>
import jax
import jax.numpy as jnp
from jax.experimental import pallas as pl
from jax.experimental.pallas import tpu as pltpu


def _round_up(x, m):
    return ((x + m - 1) // m) * m


# ----------------------------------------------------------------------------
# Pallas kernel: whole MLP (all matmuls + activations) fused per batch tile.
# refs = (x_ref, w0, ..., w{L-1}, bias_cat_ref, out_ref)
# ----------------------------------------------------------------------------
def make_ffnn_kernel(n_layers, bias_slices):
    """bias_slices[i] = (offset, padded_width) into the concatenated bias row."""

    def kernel(*refs):
        x_ref = refs[0]
        w_refs = refs[1:1 + n_layers]
        b_ref = refs[1 + n_layers]
        o_ref = refs[2 + n_layers]

        # f32 activations stream in; cast to bf16 only as an MXU operand
        # (VPU cast is filler hidden under the x DMA).
        h = x_ref[...].astype(jnp.bfloat16)
        out = None
        for i in range(n_layers):
            acc = jnp.dot(h, w_refs[i][...],
                          preferred_element_type=jnp.float32)
            off, width = bias_slices[i]                    # static Python ints
            acc = acc + b_ref[:, off:off + width]          # f32 bias broadcast
            if i < n_layers - 1:
                h = jnp.maximum(acc, 0.0).astype(jnp.bfloat16)   # ReLU
            else:
                out = jax.nn.sigmoid(acc)                        # Sigmoid (EUP)
        o_ref[...] = out.astype(o_ref.dtype)

    return kernel


# ----------------------------------------------------------------------------
# One-time parameter packing (call once, reuse across forwards).
# weights[i]: (in_i, out_i)  (transpose of torch nn.Linear weight layout)
# biases[i]:  (1, out_i)
# ----------------------------------------------------------------------------
def prepare_ffnn_params(weights, biases):
    dims = [weights[0].shape[0]] + [w.shape[1] for w in weights]
    pdims = [_round_up(d, 128) for d in dims]              # lane-dense padding

    w_p = []
    for i, w in enumerate(weights):
        w_p.append(jnp.pad(w.astype(jnp.bfloat16),
                           ((0, pdims[i] - w.shape[0]),
                            (0, pdims[i + 1] - w.shape[1]))))

    b_parts, bias_slices, off = [], [], 0
    for i, b in enumerate(biases):
        bw = pdims[i + 1]
        b_parts.append(jnp.pad(b.astype(jnp.float32),
                               ((0, 0), (0, bw - b.shape[1]))))
        bias_slices.append((off, bw))
        off += bw
    b_cat = jnp.concatenate(b_parts, axis=1)                # (1, sum(pdims[1:]))

    return dict(w_p=tuple(w_p), b_cat=b_cat, bias_slices=tuple(bias_slices),
                pdims=tuple(pdims), out_dim=weights[-1].shape[1])


# ----------------------------------------------------------------------------
# Wrapper matching FFNN.forward: x.view(N, -1) -> fc stack -> optional reshape.
# ----------------------------------------------------------------------------
def ffnn_forward(x, params, datum_out_shape=None, tile_n=512):
    w_p = params['w_p']
    b_cat = params['b_cat']
    bias_slices = params['bias_slices']
    pdims = params['pdims']
    out_dim = params['out_dim']
    n_layers = len(w_p)

    n = x.shape[0]
    x_flat = x.reshape(n, -1)                               # x.view(N, -1)
    in_dim = x_flat.shape[1]
    in_pad, out_pad = pdims[0], pdims[-1]

    # x stays in its native f32; pad feature dim only if needed (no-op here).
    x_in = x_flat if in_dim == in_pad else jnp.pad(
        x_flat, ((0, 0), (0, in_pad - in_dim)))

    # ---- batch tiling -------------------------------------------------------
    if n <= 8:
        tn = _round_up(max(n, 1), 8)                        # one clean 8-row tile
        n_pad = tn
    elif n <= 2 * tile_n:
        tn = _round_up((n + 1) // 2, 8)                     # 2 even steps -> both v7x TCs busy
        n_pad = 2 * tn
    else:
        tn = tile_n
        n_pad = _round_up(n, tn)
    if n_pad != n:
        x_in = jnp.pad(x_in, ((0, n_pad - n), (0, 0)))
    grid = (n_pad // tn,)

    # ---- VMEM budget: raise v5e's 16 MiB scoped default, stay under v7x 64 MiB
    resident = (2 * tn * in_pad * x_in.dtype.itemsize        # x (double-buffered)
                + 2 * tn * out_pad * 2                       # bf16 out (double-buffered)
                + sum(int(wp.size) * 2 for wp in w_p)        # resident bf16 weights
                + int(b_cat.size) * 4)
    vmem_limit = int(min(48 << 20, max(32 << 20, 2 * resident + (4 << 20))))

    cost = pl.CostEstimate(
        flops=2 * n_pad * sum(pdims[i] * pdims[i + 1] for i in range(n_layers)),
        transcendentals=n_pad * out_pad,                     # sigmoid exp
        bytes_accessed=(int(x_in.size) * x_in.dtype.itemsize
                        + sum(int(wp.size) * 2 for wp in w_p)
                        + int(b_cat.size) * 4
                        + n_pad * out_pad * 2))

    x_spec = pl.BlockSpec((tn, in_pad), lambda i: (i, 0))
    # On v6e, if xprof shows exposed DMA between grid steps at large tiles,
    # sweep pipeline_mode=pl.Buffered(3) on x_spec (VMEM headroom exists there).
    out_spec = pl.BlockSpec((tn, out_pad), lambda i: (i, 0))

    def _call(weight_pipeline_mode):
        if weight_pipeline_mode is None:
            resident_spec = lambda shape: pl.BlockSpec(shape, lambda i: (0, 0))
        else:
            resident_spec = lambda shape: pl.BlockSpec(
                shape, lambda i: (0, 0), pipeline_mode=weight_pipeline_mode)
        w_specs = [resident_spec(wp.shape) for wp in w_p]
        b_spec = resident_spec(b_cat.shape)
        return pl.pallas_call(
            make_ffnn_kernel(n_layers, bias_slices),
            out_shape=jax.ShapeDtypeStruct((n_pad, out_pad), jnp.bfloat16),
            grid=grid,
            in_specs=[x_spec] + w_specs + [b_spec],
            out_specs=out_spec,
            compiler_params=pltpu.CompilerParams(
                dimension_semantics=("parallel",),           # megacore on v7x
                vmem_limit_bytes=vmem_limit),
            cost_estimate=cost,
        )(x_in, *w_p, b_cat)

    try:
        # Constant-index-map weights/bias: single-buffer them (halves resident
        # weight VMEM -- matters most under v7x's 64 MiB VMEM).
        out_p = _call(pl.Buffered(1))
    except Exception:
        # Fallback if pipeline_mode / Buffered(1) is unsupported in this config.
        out_p = _call(None)

    out = out_p[:n, :out_dim]
    if datum_out_shape is not None:
        out = out.reshape(n, *datum_out_shape[1:])
    # NOTE: output is bf16 (post-sigmoid, values in [0,1]); cast to f32 here if
    # a downstream consumer truly needs it.
    return out


# ----------------------------------------------------------------------------
# Deterministic parameter init (xavier_uniform_ on weights, like the module).
# ----------------------------------------------------------------------------
def init_params(key, fc_out_chan):
    weights, biases = [], []
    for (fin, fout) in fc_out_chan:
        key, kw, kb = jax.random.split(key, 3)
        bound = jnp.sqrt(6.0 / (fin + fout))                 # xavier uniform
        w = jax.random.uniform(kw, (fin, fout), jnp.float32, -bound, bound)
        bb = 1.0 / jnp.sqrt(float(fin))                      # torch bias default
        b = jax.random.uniform(kb, (1, fout), jnp.float32, -bb, bb)
        weights.append(w)
        biases.append(b)
    return weights, biases


# ----------------------------------------------------------------------------
# Pure-JAX f32 reference for correctness.
# ----------------------------------------------------------------------------
def ffnn_ref(x, weights, biases, datum_out_shape=None):
    n = x.shape[0]
    h = x.reshape(n, -1)
    L = len(weights)
    for i, (w, b) in enumerate(zip(weights, biases)):
        h = h @ w + b
        h = jnp.maximum(h, 0.0) if i < L - 1 else jax.nn.sigmoid(h)
    if datum_out_shape is not None:
        h = h.reshape(n, *datum_out_shape[1:])
    return h


if __name__ == "__main__":
    # params analogue:
    #   datum_shape     = (N, 4, 16, 16) -> flattened feature dim = 1024
    #   fc_out_chan     = [(1024, 256), (256, 64)]
    #   datum_out_shape = (N, 4, 4, 4)
    datum_shape = (2, 4, 16, 16)
    fc_out_chan = [(1024, 256), (256, 64)]
    datum_out_shape = (2, 4, 4, 4)

    key = jax.random.PRNGKey(0)
    key, kx = jax.random.split(key)
    x = jax.random.normal(kx, datum_shape, jnp.float32)

    weights, biases = init_params(key, fc_out_chan)
    prepared = prepare_ffnn_params(weights, biases)          # one-time packing

    out = ffnn_forward(x, prepared, datum_out_shape)
    out = jax.block_until_ready(out)

    ref = ffnn_ref(x, weights, biases, datum_out_shape)
    assert out.shape == (2, 4, 4, 4), out.shape
    # bf16 MXU operands / bf16 output with f32 accumulation -> loose tolerance.
    assert jnp.allclose(out.astype(jnp.float32), ref, atol=3e-2, rtol=3e-2), \
        "mismatch vs reference"

    print("KERNEL_OK")
</pallas_src>

<mosaic_0001>
module attributes {stable_mosaic.version = 11 : i64} {
  func.func @kernel(%arg0: i32, %arg1: memref<8x1024xf32, #tpu.memory_space<vmem>>, %arg2: memref<1024x256xbf16, #tpu.memory_space<vmem>>, %arg3: memref<256x128xbf16, #tpu.memory_space<vmem>>, %arg4: memref<1x384xf32, #tpu.memory_space<vmem>>, %arg5: memref<8x128xbf16, #tpu.memory_space<vmem>>) attributes {dimension_semantics = [#tpu.dimension_semantics<parallel>], iteration_bounds = array<i64: 1>, scalar_prefetch = 0 : i64, scratch_operands = 0 : i64, tpu.core_type = #tpu.core_type<tc>, window_params = [{transform_indices = @transform_0, window_bounds = array<i64: 8, 1024>}, {pipeline_mode = #tpu.pipeline_mode<synchronous>, transform_indices = @transform_1, window_bounds = array<i64: 1024, 256>}, {pipeline_mode = #tpu.pipeline_mode<synchronous>, transform_indices = @transform_2, window_bounds = array<i64: 256, 128>}, {pipeline_mode = #tpu.pipeline_mode<synchronous>, transform_indices = @transform_3, window_bounds = array<i64: 1, 384>}, {transform_indices = @transform_4, window_bounds = array<i64: 8, 128>}]} {
    %c0 = arith.constant 0 : index
    %c0_0 = arith.constant 0 : index
    %0 = vector.load %arg1[%c0, %c0_0] : memref<8x1024xf32, #tpu.memory_space<vmem>>, vector<8x1024xf32>
    %1 = arith.truncf %0 : vector<8x1024xf32> to vector<8x1024xbf16>
    %c0_1 = arith.constant 0 : index
    %c0_2 = arith.constant 0 : index
    %2 = vector.load %arg2[%c0_1, %c0_2] : memref<1024x256xbf16, #tpu.memory_space<vmem>>, vector<1024x256xbf16>
    %cst = arith.constant dense<0.000000e+00> : vector<8x256xf32>
    %3 = tpu.matmul %1, %2, %cst {dimension_numbers = #tpu.dot_dimension_numbers<[1], [0], [0], [1], [0, 0, 1, 1], [], []>} : vector<8x1024xbf16>, vector<1024x256xbf16>, vector<8x256xf32> -> vector<8x256xf32>
    %c0_3 = arith.constant 0 : index
    %c0_4 = arith.constant 0 : index
    %4 = vector.load %arg4[%c0_3, %c0_4] : memref<1x384xf32, #tpu.memory_space<vmem>>, vector<1x256xf32>
    %5 = vector.broadcast %4 : vector<1x256xf32> to vector<8x256xf32>
    %6 = arith.addf %3, %5 : vector<8x256xf32>
    %cst_5 = arith.constant 0.000000e+00 : f32
    %7 = vector.broadcast %cst_5 : f32 to vector<8x256xf32>
    %8 = arith.maximumf %6, %7 : vector<8x256xf32>
    %9 = arith.truncf %8 : vector<8x256xf32> to vector<8x256xbf16>
    %c0_6 = arith.constant 0 : index
    %c0_7 = arith.constant 0 : index
    %10 = vector.load %arg3[%c0_6, %c0_7] : memref<256x128xbf16, #tpu.memory_space<vmem>>, vector<256x128xbf16>
    %cst_8 = arith.constant dense<0.000000e+00> : vector<8x128xf32>
    %11 = tpu.matmul %9, %10, %cst_8 {dimension_numbers = #tpu.dot_dimension_numbers<[1], [0], [0], [1], [0, 0, 1, 1], [], []>} : vector<8x256xbf16>, vector<256x128xbf16>, vector<8x128xf32> -> vector<8x128xf32>
    %c0_9 = arith.constant 0 : index
    %c256 = arith.constant 256 : index
    %12 = vector.load %arg4[%c0_9, %c256] : memref<1x384xf32, #tpu.memory_space<vmem>>, vector<1x128xf32>
    %13 = vector.broadcast %12 : vector<1x128xf32> to vector<8x128xf32>
    %14 = arith.addf %11, %13 : vector<8x128xf32>
    %15 = arith.negf %14 : vector<8x128xf32>
    %16 = math.exp %15 : vector<8x128xf32>
    %cst_10 = arith.constant 1.000000e+00 : f32
    %17 = vector.broadcast %cst_10 : f32 to vector<8x128xf32>
    %18 = arith.addf %17, %16 : vector<8x128xf32>
    %19 = arith.divf %17, %18 : vector<8x128xf32>
    %20 = arith.truncf %19 : vector<8x128xf32> to vector<8x128xbf16>
    %c0_11 = arith.constant 0 : index
    %c0_12 = arith.constant 0 : index
    %21 = vector.load %arg5[%c0_11, %c0_12] : memref<8x128xbf16, #tpu.memory_space<vmem>>, vector<8x128xbf16>
    tpu.vector_store %arg5[%c0_11, %c0_12], %20 {strides = array<i32>} : memref<8x128xbf16, #tpu.memory_space<vmem>>, vector<8x128xbf16>,
    return
  }
  func.func @transform_0(%arg0: i32) -> (i32, i32) {
    %c0_i32 = arith.constant 0 : i32
    %c0_i32_0 = arith.constant 0 : i32
    return %arg0, %c0_i32 : i32, i32
  }
  func.func @transform_1(%arg0: i32) -> (i32, i32) {
    %c0_i32 = arith.constant 0 : i32
    %c0_i32_0 = arith.constant 0 : i32
    %c0_i32_1 = arith.constant 0 : i32
    return %c0_i32, %c0_i32_0 : i32, i32
  }
  func.func @transform_2(%arg0: i32) -> (i32, i32) {
    %c0_i32 = arith.constant 0 : i32
    %c0_i32_0 = arith.constant 0 : i32
    %c0_i32_1 = arith.constant 0 : i32
    return %c0_i32, %c0_i32_0 : i32, i32
  }
  func.func @transform_3(%arg0: i32) -> (i32, i32) {
    %c0_i32 = arith.constant 0 : i32
    %c0_i32_0 = arith.constant 0 : i32
    %c0_i32_1 = arith.constant 0 : i32
    return %c0_i32, %c0_i32_0 : i32, i32
  }
  func.func @transform_4(%arg0: i32) -> (i32, i32) {
    %c0_i32 = arith.constant 0 : i32
    %c0_i32_0 = arith.constant 0 : i32
    return %arg0, %c0_i32 : i32, i32
  }
}

module attributes {stable_mosaic.version = 11 : i64} {
  func.func @kernel(%arg0: i32, %arg1: memref<8x1024xf32, #tpu.memory_space<vmem>>, %arg2: memref<1024x256xbf16, #tpu.memory_space<vmem>>, %arg3: memref<256x128xbf16, #tpu.memory_space<vmem>>, %arg4: memref<1x384xf32, #tpu.memory_space<vmem>>, %arg5: memref<8x128xbf16, #tpu.memory_space<vmem>>) attributes {dimension_semantics = [#tpu.dimension_semantics<parallel>], iteration_bounds = array<i64: 1>, scalar_prefetch = 0 : i64, scratch_operands = 0 : i64, tpu.core_type = #tpu.core_type<tc>, window_params = [{transform_indices = @transform_0, window_bounds = array<i64: 8, 1024>}, {pipeline_mode = #tpu.pipeline_mode<synchronous>, transform_indices = @transform_1, window_bounds = array<i64: 1024, 256>}, {pipeline_mode = #tpu.pipeline_mode<synchronous>, transform_indices = @transform_2, window_bounds = array<i64: 256, 128>}, {pipeline_mode = #tpu.pipeline_mode<synchronous>, transform_indices = @transform_3, window_bounds = array<i64: 1, 384>}, {transform_indices = @transform_4, window_bounds = array<i64: 8, 128>}]} {
    %c0 = arith.constant 0 : index
    %c0_0 = arith.constant 0 : index
    %0 = vector.load %arg1[%c0, %c0_0] : memref<8x1024xf32, #tpu.memory_space<vmem>>, vector<8x1024xf32>
    %1 = arith.truncf %0 : vector<8x1024xf32> to vector<8x1024xbf16>
    %c0_1 = arith.constant 0 : index
    %c0_2 = arith.constant 0 : index
    %2 = vector.load %arg2[%c0_1, %c0_2] : memref<1024x256xbf16, #tpu.memory_space<vmem>>, vector<1024x256xbf16>
    %cst = arith.constant dense<0.000000e+00> : vector<8x256xf32>
    %3 = tpu.matmul %1, %2, %cst {dimension_numbers = #tpu.dot_dimension_numbers<[1], [0], [0], [1], [0, 0, 1, 1], [], []>} : vector<8x1024xbf16>, vector<1024x256xbf16>, vector<8x256xf32> -> vector<8x256xf32>
    %c0_3 = arith.constant 0 : index
    %c0_4 = arith.constant 0 : index
    %4 = vector.load %arg4[%c0_3, %c0_4] : memref<1x384xf32, #tpu.memory_space<vmem>>, vector<1x256xf32>
    %5 = vector.broadcast %4 : vector<1x256xf32> to vector<8x256xf32>
    %6 = arith.addf %3, %5 : vector<8x256xf32>
    %cst_5 = arith.constant 0.000000e+00 : f32
    %7 = vector.broadcast %cst_5 : f32 to vector<8x256xf32>
    %8 = arith.maximumf %6, %7 : vector<8x256xf32>
    %9 = arith.truncf %8 : vector<8x256xf32> to vector<8x256xbf16>
    %c0_6 = arith.constant 0 : index
    %c0_7 = arith.constant 0 : index
    %10 = vector.load %arg3[%c0_6, %c0_7] : memref<256x128xbf16, #tpu.memory_space<vmem>>, vector<256x128xbf16>
    %cst_8 = arith.constant dense<0.000000e+00> : vector<8x128xf32>
    %11 = tpu.matmul %9, %10, %cst_8 {dimension_numbers = #tpu.dot_dimension_numbers<[1], [0], [0], [1], [0, 0, 1, 1], [], []>} : vector<8x256xbf16>, vector<256x128xbf16>, vector<8x128xf32> -> vector<8x128xf32>
    %c0_9 = arith.constant 0 : index
    %c256 = arith.constant 256 : index
    %12 = vector.load %arg4[%c0_9, %c256] : memref<1x384xf32, #tpu.memory_space<vmem>>, vector<1x128xf32>
    %13 = vector.broadcast %12 : vector<1x128xf32> to vector<8x128xf32>
    %14 = arith.addf %11, %13 : vector<8x128xf32>
    %15 = arith.negf %14 : vector<8x128xf32>
    %16 = math.exp %15 : vector<8x128xf32>
    %cst_10 = arith.constant 1.000000e+00 : f32
    %17 = vector.broadcast %cst_10 : f32 to vector<8x128xf32>
    %18 = arith.addf %17, %16 : vector<8x128xf32>
    %19 = arith.divf %17, %18 : vector<8x128xf32>
    %20 = arith.truncf %19 : vector<8x128xf32> to vector<8x128xbf16>
    %c0_11 = arith.constant 0 : index
    %c0_12 = arith.constant 0 : index
    %21 = vector.load %arg5[%c0_11, %c0_12] : memref<8x128xbf16, #tpu.memory_space<vmem>>, vector<8x128xbf16>
    tpu.vector_store %arg5[%c0_11, %c0_12], %20 {strides = array<i32>} : memref<8x128xbf16, #tpu.memory_space<vmem>>, vector<8x128xbf16>,
    return
  }
  func.func @transform_0(%arg0: i32) -> (i32, i32) {
    %c0_i32 = arith.constant 0 : i32
    %c0_i32_0 = arith.constant 0 : i32
    return %arg0, %c0_i32 : i32, i32
  }
  func.func @transform_1(%arg0: i32) -> (i32, i32) {
    %c0_i32 = arith.constant 0 : i32
    %c0_i32_0 = arith.constant 0 : i32
    %c0_i32_1 = arith.constant 0 : i32
    return %c0_i32, %c0_i32_0 : i32, i32
  }
  func.func @transform_2(%arg0: i32) -> (i32, i32) {
    %c0_i32 = arith.constant 0 : i32
    %c0_i32_0 = arith.constant 0 : i32
    %c0_i32_1 = arith.constant 0 : i32
    return %c0_i32, %c0_i32_0 : i32, i32
  }
  func.func @transform_3(%arg0: i32) -> (i32, i32) {
    %c0_i32 = arith.constant 0 : i32
    %c0_i32_0 = arith.constant 0 : i32
    %c0_i32_1 = arith.constant 0 : i32
    return %c0_i32, %c0_i32_0 : i32, i32
  }
  func.func @transform_4(%arg0: i32) -> (i32, i32) {
    %c0_i32 = arith.constant 0 : i32
    %c0_i32_0 = arith.constant 0 : i32
    return %arg0, %c0_i32 : i32, i32
  }
}

</mosaic_0001>

<llo_original>
// kernel: tpu_custom_call.1
$region0: #{tpu_custom_call.1}
  #allocation0 [shape = 'u32[]', space=smem, size = 0x4, offset = 0x4, fixed_abs, tag = 'smem constant byte address 0x4 - core index']
  #allocation1 [shape = 'u32[72,128]{1,0:T(1,128)}', space=vmem, size = 0x9000, scoped, tag = 'internal scratch']
  %s0 = inlined_call_operand.hbm [shape: f32[8,1024], index: 0, kind: input, shape index: {}]
  %s1 = inlined_call_operand.hbm [shape: bf16[1024,256], index: 1, kind: input, shape index: {}]
  %s2 = inlined_call_operand.hbm [shape: bf16[256,128], index: 2, kind: input, shape index: {}]
  %s3 = inlined_call_operand.hbm [shape: f32[1,384], index: 3, kind: input, shape index: {}]
  %s4 = inlined_call_operand.hbm [shape: bf16[8,128], index: 4, kind: output, shape index: {}]
  %s5 = sld [smem:[#allocation0]]
  $region42: #{tpu_custom_call.1} parent=0
    _
  %s7 = ssub.s32 1, %s5
  %s8 = scalar_select 0, %s7, %s5
  $region1: #{tpu_custom_call.1} parent=0
    #allocation2 [shape = 'u8[32768]{0}', space=vmem, size = 0x8000, scoped, tag = 'input window, operand 0, single buffered']
    #allocation3 [shape = 's32[1]{0}', space=sflag, size = 0x4, scoped, tag = 'scoped memory for tpu_custom_call.1']
    #allocation4 [shape = 's32[1]{0}', space=sflag, size = 0x4, scoped, tag = 'scoped memory for tpu_custom_call.1']
    #allocation5 [shape = 'u8[524288]{0}', space=vmem, size = 0x80000, scoped, tag = 'input window, operand 1, single buffered']
    #allocation6 [shape = 's32[1]{0}', space=sflag, size = 0x4, scoped, tag = 'scoped memory for tpu_custom_call.1']
    #allocation7 [shape = 'u8[65536]{0}', space=vmem, size = 0x10000, scoped, tag = 'input window, operand 2, single buffered']
    #allocation8 [shape = 'u8[1536]{0}', space=vmem, size = 0x800, scoped, tag = 'input window, operand 3, single buffered']
    #allocation9 [shape = 's32[1]{0}', space=sflag, size = 0x4, scoped, tag = 'scoped memory for tpu_custom_call.1']
    #allocation10 [shape = 'u8[2048]{0}', space=vmem, size = 0x800, scoped, tag = 'output window, operand 0, single buffered']
    %9 = vsyncpa [#allocation3], 0
    %10 = vsyncpa [#allocation6], 0
    %11 = vsyncpa [#allocation9], 0
    %12 = vsyncpa [#allocation4], 0
    // Predicated region
    $region2: #{tpu_custom_call.1} parent=1 // pred_check
      _
    $region3: #{tpu_custom_call.1} parent=1 // pred_check_branch
      %14 = sbr.rel (0) target = $region5
    $region4: #{tpu_custom_call.1} parent=1 // pred_region
      %16 = vsyncadd [#allocation3], 0
      %s18 = sshll.u32 %s0, 4
      %s19 = int_to_ptr.hbm [resolvable:$true] %s18
      %s20 = sshll.u32 [#allocation2], 4
      %s21 = int_to_ptr.vmem [resolvable:$true] %s20
      %23 = dma.hbm_to_vmem [thread:$0]  %s19, 1024, %s21, [#allocation3]
    $region5: #{tpu_custom_call.1} parent=1 // pred_fallthru
      _
    // Predicated region
    $region6: #{tpu_custom_call.1} parent=1 // pred_check
      _
    $region7: #{tpu_custom_call.1} parent=1 // pred_check_branch
      %25 = sbr.rel (0) target = $region9
    $region8: #{tpu_custom_call.1} parent=1 // pred_region
      %27 = vsyncadd [#allocation6], 0
      %s28 = sshll.u32 %s1, 4
      %s29 = int_to_ptr.hbm [resolvable:$true] %s28
      %s30 = sshll.u32 [#allocation5], 4
      %s31 = int_to_ptr.vmem [resolvable:$true] %s30
      %36 = dma.hbm_to_vmem [thread:$0]  %s29, 16384, %s31, [#allocation6], 128, 128, 8
    $region9: #{tpu_custom_call.1} parent=1 // pred_fallthru
      _
    // Predicated region
    $region10: #{tpu_custom_call.1} parent=1 // pred_check
      _
    $region11: #{tpu_custom_call.1} parent=1 // pred_check_branch
      %38 = sbr.rel (0) target = $region13
    $region12: #{tpu_custom_call.1} parent=1 // pred_region
      %40 = vsyncadd [#allocation6], 0
      %s41 = sshll.u32 %s2, 4
      %s42 = int_to_ptr.hbm [resolvable:$true] %s41
      %s43 = sshll.u32 [#allocation7], 4
      %s44 = int_to_ptr.vmem [resolvable:$true] %s43
      %49 = dma.hbm_to_vmem [thread:$0]  %s42, 2048, %s44, [#allocation6], 64, 64, 4
    $region13: #{tpu_custom_call.1} parent=1 // pred_fallthru
      _
    // Predicated region
    $region14: #{tpu_custom_call.1} parent=1 // pred_check
      _
    $region15: #{tpu_custom_call.1} parent=1 // pred_check_branch
      %51 = sbr.rel (0) target = $region17
    $region16: #{tpu_custom_call.1} parent=1 // pred_region
      %53 = vsyncadd [#allocation9], 0
      %s55 = sshll.u32 %s3, 4
      %s56 = int_to_ptr.hbm [resolvable:$true] %s55
      %s57 = sshll.u32 [#allocation8], 4
      %s58 = int_to_ptr.vmem [resolvable:$true] %s57
      %60 = dma.hbm_to_vmem [thread:$0]  %s56, 48, %s58, [#allocation9]
    $region17: #{tpu_custom_call.1} parent=1 // pred_fallthru
      _
    // Predicated region
    $region18: #{tpu_custom_call.1} parent=1 // pred_check
      _
    $region19: #{tpu_custom_call.1} parent=1 // pred_check_branch
      %62 = sbr.rel (0) target = $region21
    $region20: #{tpu_custom_call.1} parent=1 // pred_region
      %64 = dma.done [#allocation3], 1024
    $region21: #{tpu_custom_call.1} parent=1 // pred_fallthru
      _
    // Predicated region
    $region22: #{tpu_custom_call.1} parent=1 // pred_check
      _
    $region23: #{tpu_custom_call.1} parent=1 // pred_check_branch
      %66 = sbr.rel (0) target = $region25
    $region24: #{tpu_custom_call.1} parent=1 // pred_region
      %68 = dma.done [#allocation6], 16384
    $region25: #{tpu_custom_call.1} parent=1 // pred_fallthru
      _
    // Predicated region
    $region26: #{tpu_custom_call.1} parent=1 // pred_check
      _
    $region27: #{tpu_custom_call.1} parent=1 // pred_check_branch
      %70 = sbr.rel (0) target = $region29
    $region28: #{tpu_custom_call.1} parent=1 // pred_region
      %72 = dma.done [#allocation6], 2048
    $region29: #{tpu_custom_call.1} parent=1 // pred_fallthru
      _
    // Predicated region
    $region30: #{tpu_custom_call.1} parent=1 // pred_check
      _
    $region31: #{tpu_custom_call.1} parent=1 // pred_check_branch
      %74 = sbr.rel (0) target = $region33
    $region32: #{tpu_custom_call.1} parent=1 // pred_region
      %76 = dma.done [#allocation9], 48
    $region33: #{tpu_custom_call.1} parent=1 // pred_fallthru
      _
    %v77 = vld [vmem:[#allocation2] sm:$0xff]
    %v78 = vld [vmem:[#allocation2 + $0x8] sm:$0xff]
    %v79 = vld [vmem:[#allocation2 + $0x10] sm:$0xff]
    %v80 = vld [vmem:[#allocation2 + $0x18] sm:$0xff]
    %v81 = vld [vmem:[#allocation2 + $0x20] sm:$0xff]
    %v82 = vld [vmem:[#allocation2 + $0x28] sm:$0xff]
    %v83 = vld [vmem:[#allocation2 + $0x30] sm:$0xff]
    %v84 = vld [vmem:[#allocation2 + $0x38] sm:$0xff]
    %v85 = vpack.c.bf16 %v77, %v77
    %v86 = vpack.c.bf16 %v78, %v78
    %v87 = vpack.c.bf16 %v79, %v79
    %v88 = vpack.c.bf16 %v80, %v80
    %v89 = vpack.c.bf16 %v81, %v81
    %v90 = vpack.c.bf16 %v82, %v82
    %v91 = vpack.c.bf16 %v83, %v83
    %v92 = vpack.c.bf16 %v84, %v84
    %v93 = vld [vmem:[#allocation5] sm:$0xff]
    %v94 = vld [vmem:[#allocation5 + $0x8] sm:$0xff]
    %v95 = vld [vmem:[#allocation5 + $0x10] sm:$0xff]
    %v96 = vld [vmem:[#allocation5 + $0x18] sm:$0xff]
    %v97 = vld [vmem:[#allocation5 + $0x20] sm:$0xff]
    %v98 = vld [vmem:[#allocation5 + $0x28] sm:$0xff]
    %v99 = vld [vmem:[#allocation5 + $0x30] sm:$0xff]
    %v100 = vld [vmem:[#allocation5 + $0x38] sm:$0xff]
    %v101 = vld [vmem:[#allocation5 + $0x40] sm:$0xff]
    %v102 = vld [vmem:[#allocation5 + $0x48] sm:$0xff]
    %v103 = vld [vmem:[#allocation5 + $0x50] sm:$0xff]
    %v104 = vld [vmem:[#allocation5 + $0x58] sm:$0xff]
    %v105 = vld [vmem:[#allocation5 + $0x60] sm:$0xff]
    %v106 = vld [vmem:[#allocation5 + $0x68] sm:$0xff]
    %v107 = vld [vmem:[#allocation5 + $0x70] sm:$0xff]
    %v108 = vld [vmem:[#allocation5 + $0x78] sm:$0xff]
    %v109 = vld [vmem:[#allocation5 + $0x80] sm:$0xff]
    %v110 = vld [vmem:[#allocation5 + $0x88] sm:$0xff]
    %v111 = vld [vmem:[#allocation5 + $0x90] sm:$0xff]
    %v112 = vld [vmem:[#allocation5 + $0x98] sm:$0xff]
    %v113 = vld [vmem:[#allocation5 + $0xa0] sm:$0xff]
    %v114 = vld [vmem:[#allocation5 + $0xa8] sm:$0xff]
    %v115 = vld [vmem:[#allocation5 + $0xb0] sm:$0xff]
    %v116 = vld [vmem:[#allocation5 + $0xb8] sm:$0xff]
    %v117 = vld [vmem:[#allocation5 + $0xc0] sm:$0xff]
    %v118 = vld [vmem:[#allocation5 + $0xc8] sm:$0xff]
    %v119 = vld [vmem:[#allocation5 + $0xd0] sm:$0xff]
    %v120 = vld [vmem:[#allocation5 + $0xd8] sm:$0xff]
    %v121 = vld [vmem:[#allocation5 + $0xe0] sm:$0xff]
    %v122 = vld [vmem:[#allocation5 + $0xe8] sm:$0xff]
    %v123 = vld [vmem:[#allocation5 + $0xf0] sm:$0xff]
    %v124 = vld [vmem:[#allocation5 + $0xf8] sm:$0xff]
    %v125 = vld [vmem:[#allocation5 + $0x100] sm:$0xff]
    %v126 = vld [vmem:[#allocation5 + $0x108] sm:$0xff]
    %v127 = vld [vmem:[#allocation5 + $0x110] sm:$0xff]
    %v128 = vld [vmem:[#allocation5 + $0x118] sm:$0xff]
    %v129 = vld [vmem:[#allocation5 + $0x120] sm:$0xff]
    %v130 = vld [vmem:[#allocation5 + $0x128] sm:$0xff]
    %v131 = vld [vmem:[#allocation5 + $0x130] sm:$0xff]
    %v132 = vld [vmem:[#allocation5 + $0x138] sm:$0xff]
    %v133 = vld [vmem:[#allocation5 + $0x140] sm:$0xff]
    %v134 = vld [vmem:[#allocation5 + $0x148] sm:$0xff]
    %v135 = vld [vmem:[#allocation5 + $0x150] sm:$0xff]
    %v136 = vld [vmem:[#allocation5 + $0x158] sm:$0xff]
    %v137 = vld [vmem:[#allocation5 + $0x160] sm:$0xff]
    %v138 = vld [vmem:[#allocation5 + $0x168] sm:$0xff]
    %v139 = vld [vmem:[#allocation5 + $0x170] sm:$0xff]
    %v140 = vld [vmem:[#allocation5 + $0x178] sm:$0xff]
    %v141 = vld [vmem:[#allocation5 + $0x180] sm:$0xff]
    %v142 = vld [vmem:[#allocation5 + $0x188] sm:$0xff]
    %v143 = vld [vmem:[#allocation5 + $0x190] sm:$0xff]
    %v144 = vld [vmem:[#allocation5 + $0x198] sm:$0xff]
    %v145 = vld [vmem:[#allocation5 + $0x1a0] sm:$0xff]
    %v146 = vld [vmem:[#allocation5 + $0x1a8] sm:$0xff]
    %v147 = vld [vmem:[#allocation5 + $0x1b0] sm:$0xff]
    %v148 = vld [vmem:[#allocation5 + $0x1b8] sm:$0xff]
    %v149 = vld [vmem:[#allocation5 + $0x1c0] sm:$0xff]
    %v150 = vld [vmem:[#allocation5 + $0x1c8] sm:$0xff]
    %v151 = vld [vmem:[#allocation5 + $0x1d0] sm:$0xff]
    %v152 = vld [vmem:[#allocation5 + $0x1d8] sm:$0xff]
    %v153 = vld [vmem:[#allocation5 + $0x1e0] sm:$0xff]
    %v154 = vld [vmem:[#allocation5 + $0x1e8] sm:$0xff]
    %v155 = vld [vmem:[#allocation5 + $0x1f0] sm:$0xff]
    %v156 = vld [vmem:[#allocation5 + $0x1f8] sm:$0xff]
    %v157 = vld [vmem:[#allocation5 + $0x200] sm:$0xff]
    %v158 = vld [vmem:[#allocation5 + $0x208] sm:$0xff]
    %v159 = vld [vmem:[#allocation5 + $0x210] sm:$0xff]
    %v160 = vld [vmem:[#allocation5 + $0x218] sm:$0xff]
    %v161 = vld [vmem:[#allocation5 + $0x220] sm:$0xff]
    %v162 = vld [vmem:[#allocation5 + $0x228] sm:$0xff]
    %v163 = vld [vmem:[#allocation5 + $0x230] sm:$0xff]
    %v164 = vld [vmem:[#allocation5 + $0x238] sm:$0xff]
    %v165 = vld [vmem:[#allocation5 + $0x240] sm:$0xff]
    %v166 = vld [vmem:[#allocation5 + $0x248] sm:$0xff]
    %v167 = vld [vmem:[#allocation5 + $0x250] sm:$0xff]
    %v168 = vld [vmem:[#allocation5 + $0x258] sm:$0xff]
    %v169 = vld [vmem:[#allocation5 + $0x260] sm:$0xff]
    %v170 = vld [vmem:[#allocation5 + $0x268] sm:$0xff]
    %v171 = vld [vmem:[#allocation5 + $0x270] sm:$0xff]
    %v172 = vld [vmem:[#allocation5 + $0x278] sm:$0xff]
    %v173 = vld [vmem:[#allocation5 + $0x280] sm:$0xff]
    %v174 = vld [vmem:[#allocation5 + $0x288] sm:$0xff]
    %v175 = vld [vmem:[#allocation5 + $0x290] sm:$0xff]
    %v176 = vld [vmem:[#allocation5 + $0x298] sm:$0xff]
    %v177 = vld [vmem:[#allocation5 + $0x2a0] sm:$0xff]
    %v178 = vld [vmem:[#allocation5 + $0x2a8] sm:$0xff]
    %v179 = vld [vmem:[#allocation5 + $0x2b0] sm:$0xff]
    %v180 = vld [vmem:[#allocation5 + $0x2b8] sm:$0xff]
    %v181 = vld [vmem:[#allocation5 + $0x2c0] sm:$0xff]
    %v182 = vld [vmem:[#allocation5 + $0x2c8] sm:$0xff]
    %v183 = vld [vmem:[#allocation5 + $0x2d0] sm:$0xff]
    %v184 = vld [vmem:[#allocation5 + $0x2d8] sm:$0xff]
    %v185 = vld [vmem:[#allocation5 + $0x2e0] sm:$0xff]
    %v186 = vld [vmem:[#allocation5 + $0x2e8] sm:$0xff]
    %v187 = vld [vmem:[#allocation5 + $0x2f0] sm:$0xff]
    %v188 = vld [vmem:[#allocation5 + $0x2f8] sm:$0xff]
    %v189 = vld [vmem:[#allocation5 + $0x300] sm:$0xff]
    %v190 = vld [vmem:[#allocation5 + $0x308] sm:$0xff]
    %v191 = vld [vmem:[#allocation5 + $0x310] sm:$0xff]
    %v192 = vld [vmem:[#allocation5 + $0x318] sm:$0xff]
    %v193 = vld [vmem:[#allocation5 + $0x320] sm:$0xff]
    %v194 = vld [vmem:[#allocation5 + $0x328] sm:$0xff]
    %v195 = vld [vmem:[#allocation5 + $0x330] sm:$0xff]
    %v196 = vld [vmem:[#allocation5 + $0x338] sm:$0xff]
    %v197 = vld [vmem:[#allocation5 + $0x340] sm:$0xff]
    %v198 = vld [vmem:[#allocation5 + $0x348] sm:$0xff]
    %v199 = vld [vmem:[#allocation5 + $0x350] sm:$0xff]
    %v200 = vld [vmem:[#allocation5 + $0x358] sm:$0xff]
    %v201 = vld [vmem:[#allocation5 + $0x360] sm:$0xff]
    %v202 = vld [vmem:[#allocation5 + $0x368] sm:$0xff]
    %v203 = vld [vmem:[#allocation5 + $0x370] sm:$0xff]
    %v204 = vld [vmem:[#allocation5 + $0x378] sm:$0xff]
    %v205 = vld [vmem:[#allocation5 + $0x380] sm:$0xff]
    %v206 = vld [vmem:[#allocation5 + $0x388] sm:$0xff]
    %v207 = vld [vmem:[#allocation5 + $0x390] sm:$0xff]
    %v208 = vld [vmem:[#allocation5 + $0x398] sm:$0xff]
    %v209 = vld [vmem:[#allocation5 + $0x3a0] sm:$0xff]
    %v210 = vld [vmem:[#allocation5 + $0x3a8] sm:$0xff]
    %v211 = vld [vmem:[#allocation5 + $0x3b0] sm:$0xff]
    %v212 = vld [vmem:[#allocation5 + $0x3b8] sm:$0xff]
    %v213 = vld [vmem:[#allocation5 + $0x3c0] sm:$0xff]
    %v214 = vld [vmem:[#allocation5 + $0x3c8] sm:$0xff]
    %v215 = vld [vmem:[#allocation5 + $0x3d0] sm:$0xff]
    %v216 = vld [vmem:[#allocation5 + $0x3d8] sm:$0xff]
    %v217 = vld [vmem:[#allocation5 + $0x3e0] sm:$0xff]
    %v218 = vld [vmem:[#allocation5 + $0x3e8] sm:$0xff]
    %v219 = vld [vmem:[#allocation5 + $0x3f0] sm:$0xff]
    %v220 = vld [vmem:[#allocation5 + $0x3f8] sm:$0xff]
    %v221 = vld [vmem:[#allocation8] sm:$0x3]
    %v223 = vperm.slane %v221, 0
    %v224 = vperm.slane %v221, 1
    %v355 = vunpack.c.l.b16 %v93
    %v356 = vunpack.c.h.b16 %v93
    %v357 = vunpack.c.l.b16 %v94
    %v358 = vunpack.c.h.b16 %v94
    %v359 = vunpack.c.l.b16 %v95
    %v360 = vunpack.c.h.b16 %v95
    %v361 = vunpack.c.l.b16 %v96
    %v362 = vunpack.c.h.b16 %v96
    %v363 = vunpack.c.l.b16 %v97
    %v364 = vunpack.c.h.b16 %v97
    %v365 = vunpack.c.l.b16 %v98
    %v366 = vunpack.c.h.b16 %v98
    %v367 = vunpack.c.l.b16 %v99
    %v368 = vunpack.c.h.b16 %v99
    %v369 = vunpack.c.l.b16 %v100
    %v370 = vunpack.c.h.b16 %v100
    %v371 = vunpack.c.l.b16 %v101
    %v372 = vunpack.c.h.b16 %v101
    %v373 = vunpack.c.l.b16 %v102
    %v374 = vunpack.c.h.b16 %v102
    %v375 = vunpack.c.l.b16 %v103
    %v376 = vunpack.c.h.b16 %v103
    %v377 = vunpack.c.l.b16 %v104
    %v378 = vunpack.c.h.b16 %v104
    %v379 = vunpack.c.l.b16 %v105
    %v380 = vunpack.c.h.b16 %v105
    %v381 = vunpack.c.l.b16 %v106
    %v382 = vunpack.c.h.b16 %v106
    %v383 = vunpack.c.l.b16 %v107
    %v384 = vunpack.c.h.b16 %v107
    %v385 = vunpack.c.l.b16 %v108
    %v386 = vunpack.c.h.b16 %v108
    %v387 = vunpack.c.l.b16 %v109
    %v388 = vunpack.c.h.b16 %v109
    %v389 = vunpack.c.l.b16 %v110
    %v390 = vunpack.c.h.b16 %v110
    %v391 = vunpack.c.l.b16 %v111
    %v392 = vunpack.c.h.b16 %v111
    %v393 = vunpack.c.l.b16 %v112
    %v394 = vunpack.c.h.b16 %v112
    %v395 = vunpack.c.l.b16 %v113
    %v396 = vunpack.c.h.b16 %v113
    %v397 = vunpack.c.l.b16 %v114
    %v398 = vunpack.c.h.b16 %v114
    %v399 = vunpack.c.l.b16 %v115
    %v400 = vunpack.c.h.b16 %v115
    %v401 = vunpack.c.l.b16 %v116
    %v402 = vunpack.c.h.b16 %v116
    %v403 = vunpack.c.l.b16 %v117
    %v404 = vunpack.c.h.b16 %v117
    %v405 = vunpack.c.l.b16 %v118
    %v406 = vunpack.c.h.b16 %v118
    %v407 = vunpack.c.l.b16 %v119
    %v408 = vunpack.c.h.b16 %v119
    %v409 = vunpack.c.l.b16 %v120
    %v410 = vunpack.c.h.b16 %v120
    %v411 = vunpack.c.l.b16 %v121
    %v412 = vunpack.c.h.b16 %v121
    %v413 = vunpack.c.l.b16 %v122
    %v414 = vunpack.c.h.b16 %v122
    %v415 = vunpack.c.l.b16 %v123
    %v416 = vunpack.c.h.b16 %v123
    %v417 = vunpack.c.l.b16 %v124
    %v418 = vunpack.c.h.b16 %v124
    %v419 = vunpack.c.l.b16 %v125
    %v420 = vunpack.c.h.b16 %v125
    %v421 = vunpack.c.l.b16 %v126
    %v422 = vunpack.c.h.b16 %v126
    %v423 = vunpack.c.l.b16 %v127
    %v424 = vunpack.c.h.b16 %v127
    %v425 = vunpack.c.l.b16 %v128
    %v426 = vunpack.c.h.b16 %v128
    %v427 = vunpack.c.l.b16 %v129
    %v428 = vunpack.c.h.b16 %v129
    %v429 = vunpack.c.l.b16 %v130
    %v430 = vunpack.c.h.b16 %v130
    %v431 = vunpack.c.l.b16 %v131
    %v432 = vunpack.c.h.b16 %v131
    %v433 = vunpack.c.l.b16 %v132
    %v434 = vunpack.c.h.b16 %v132
    %v435 = vunpack.c.l.b16 %v133
    %v436 = vunpack.c.h.b16 %v133
    %v437 = vunpack.c.l.b16 %v134
    %v438 = vunpack.c.h.b16 %v134
    %v439 = vunpack.c.l.b16 %v135
    %v440 = vunpack.c.h.b16 %v135
    %v441 = vunpack.c.l.b16 %v136
    %v442 = vunpack.c.h.b16 %v136
    %v443 = vunpack.c.l.b16 %v137
    %v444 = vunpack.c.h.b16 %v137
    %v445 = vunpack.c.l.b16 %v138
    %v446 = vunpack.c.h.b16 %v138
    %v447 = vunpack.c.l.b16 %v139
    %v448 = vunpack.c.h.b16 %v139
    %v449 = vunpack.c.l.b16 %v140
    %v450 = vunpack.c.h.b16 %v140
    %v451 = vunpack.c.l.b16 %v141
    %v452 = vunpack.c.h.b16 %v141
    %v453 = vunpack.c.l.b16 %v142
    %v454 = vunpack.c.h.b16 %v142
    %v455 = vunpack.c.l.b16 %v143
    %v456 = vunpack.c.h.b16 %v143
    %v457 = vunpack.c.l.b16 %v144
    %v458 = vunpack.c.h.b16 %v144
    %v459 = vunpack.c.l.b16 %v145
    %v460 = vunpack.c.h.b16 %v145
    %v461 = vunpack.c.l.b16 %v146
    %v462 = vunpack.c.h.b16 %v146
    %v463 = vunpack.c.l.b16 %v147
    %v464 = vunpack.c.h.b16 %v147
    %v465 = vunpack.c.l.b16 %v148
    %v466 = vunpack.c.h.b16 %v148
    %v467 = vunpack.c.l.b16 %v149
    %v468 = vunpack.c.h.b16 %v149
    %v469 = vunpack.c.l.b16 %v150
    %v470 = vunpack.c.h.b16 %v150
    %v471 = vunpack.c.l.b16 %v151
    %v472 = vunpack.c.h.b16 %v151
    %v473 = vunpack.c.l.b16 %v152
    %v474 = vunpack.c.h.b16 %v152
    %v475 = vunpack.c.l.b16 %v153
    %v476 = vunpack.c.h.b16 %v153
    %v477 = vunpack.c.l.b16 %v154
    %v478 = vunpack.c.h.b16 %v154
    %v479 = vunpack.c.l.b16 %v155
    %v480 = vunpack.c.h.b16 %v155
    %v481 = vunpack.c.l.b16 %v156
    %v482 = vunpack.c.h.b16 %v156
    %v483 = vunpack.c.l.b16 %v157
    %v484 = vunpack.c.h.b16 %v157
    %v485 = vunpack.c.l.b16 %v158
    %v486 = vunpack.c.h.b16 %v158
    %v487 = vunpack.c.l.b16 %v159
    %v488 = vunpack.c.h.b16 %v159
    %v489 = vunpack.c.l.b16 %v160
    %v490 = vunpack.c.h.b16 %v160
    %v491 = vunpack.c.l.b16 %v161
    %v492 = vunpack.c.h.b16 %v161
    %v493 = vunpack.c.l.b16 %v162
    %v494 = vunpack.c.h.b16 %v162
    %v495 = vunpack.c.l.b16 %v163
    %v496 = vunpack.c.h.b16 %v163
    %v497 = vunpack.c.l.b16 %v164
    %v498 = vunpack.c.h.b16 %v164
    %v499 = vunpack.c.l.b16 %v165
    %v500 = vunpack.c.h.b16 %v165
    %v501 = vunpack.c.l.b16 %v166
    %v502 = vunpack.c.h.b16 %v166
    %v503 = vunpack.c.l.b16 %v167
    %v504 = vunpack.c.h.b16 %v167
    %v505 = vunpack.c.l.b16 %v168
    %v506 = vunpack.c.h.b16 %v168
    %v507 = vunpack.c.l.b16 %v169
    %v508 = vunpack.c.h.b16 %v169
    %v509 = vunpack.c.l.b16 %v170
    %v510 = vunpack.c.h.b16 %v170
    %v511 = vunpack.c.l.b16 %v171
    %v512 = vunpack.c.h.b16 %v171
    %v513 = vunpack.c.l.b16 %v172
    %v514 = vunpack.c.h.b16 %v172
    %v515 = vunpack.c.l.b16 %v173
    %v516 = vunpack.c.h.b16 %v173
    %v517 = vunpack.c.l.b16 %v174
    %v518 = vunpack.c.h.b16 %v174
    %v519 = vunpack.c.l.b16 %v175
    %v520 = vunpack.c.h.b16 %v175
    %v521 = vunpack.c.l.b16 %v176
    %v522 = vunpack.c.h.b16 %v176
    %v523 = vunpack.c.l.b16 %v177
    %v524 = vunpack.c.h.b16 %v177
    %v525 = vunpack.c.l.b16 %v178
    %v526 = vunpack.c.h.b16 %v178
    %v527 = vunpack.c.l.b16 %v179
    %v528 = vunpack.c.h.b16 %v179
    %v529 = vunpack.c.l.b16 %v180
    %v530 = vunpack.c.h.b16 %v180
    %v531 = vunpack.c.l.b16 %v181
    %v532 = vunpack.c.h.b16 %v181
    %v533 = vunpack.c.l.b16 %v182
    %v534 = vunpack.c.h.b16 %v182
    %v535 = vunpack.c.l.b16 %v183
    %v536 = vunpack.c.h.b16 %v183
    %v537 = vunpack.c.l.b16 %v184
    %v538 = vunpack.c.h.b16 %v184
    %v539 = vunpack.c.l.b16 %v185
    %v540 = vunpack.c.h.b16 %v185
    %v541 = vunpack.c.l.b16 %v186
    %v542 = vunpack.c.h.b16 %v186
    %v543 = vunpack.c.l.b16 %v187
    %v544 = vunpack.c.h.b16 %v187
    %v545 = vunpack.c.l.b16 %v188
    %v546 = vunpack.c.h.b16 %v188
    %v547 = vunpack.c.l.b16 %v189
    %v548 = vunpack.c.h.b16 %v189
    %v549 = vunpack.c.l.b16 %v190
    %v550 = vunpack.c.h.b16 %v190
    %v551 = vunpack.c.l.b16 %v191
    %v552 = vunpack.c.h.b16 %v191
    %v553 = vunpack.c.l.b16 %v192
    %v554 = vunpack.c.h.b16 %v192
    %v555 = vunpack.c.l.b16 %v193
    %v556 = vunpack.c.h.b16 %v193
    %v557 = vunpack.c.l.b16 %v194
    %v558 = vunpack.c.h.b16 %v194
    %v559 = vunpack.c.l.b16 %v195
    %v560 = vunpack.c.h.b16 %v195
    %v561 = vunpack.c.l.b16 %v196
    %v562 = vunpack.c.h.b16 %v196
    %v563 = vunpack.c.l.b16 %v197
    %v564 = vunpack.c.h.b16 %v197
    %v565 = vunpack.c.l.b16 %v198
    %v566 = vunpack.c.h.b16 %v198
    %v567 = vunpack.c.l.b16 %v199
    %v568 = vunpack.c.h.b16 %v199
    %v569 = vunpack.c.l.b16 %v200
    %v570 = vunpack.c.h.b16 %v200
    %v571 = vunpack.c.l.b16 %v201
    %v572 = vunpack.c.h.b16 %v201
    %v573 = vunpack.c.l.b16 %v202
    %v574 = vunpack.c.h.b16 %v202
    %v575 = vunpack.c.l.b16 %v203
    %v576 = vunpack.c.h.b16 %v203
    %v577 = vunpack.c.l.b16 %v204
    %v578 = vunpack.c.h.b16 %v204
    %v579 = vunpack.c.l.b16 %v205
    %v580 = vunpack.c.h.b16 %v205
    %v581 = vunpack.c.l.b16 %v206
    %v582 = vunpack.c.h.b16 %v206
    %v583 = vunpack.c.l.b16 %v207
    %v584 = vunpack.c.h.b16 %v207
    %v585 = vunpack.c.l.b16 %v208
    %v586 = vunpack.c.h.b16 %v208
    %v587 = vunpack.c.l.b16 %v209
    %v588 = vunpack.c.h.b16 %v209
    %v589 = vunpack.c.l.b16 %v210
    %v590 = vunpack.c.h.b16 %v210
    %v591 = vunpack.c.l.b16 %v211
    %v592 = vunpack.c.h.b16 %v211
    %v593 = vunpack.c.l.b16 %v212
    %v594 = vunpack.c.h.b16 %v212
    %v595 = vunpack.c.l.b16 %v213
    %v596 = vunpack.c.h.b16 %v213
    %v597 = vunpack.c.l.b16 %v214
    %v598 = vunpack.c.h.b16 %v214
    %v599 = vunpack.c.l.b16 %v215
    %v600 = vunpack.c.h.b16 %v215
    %v601 = vunpack.c.l.b16 %v216
    %v602 = vunpack.c.h.b16 %v216
    %v603 = vunpack.c.l.b16 %v217
    %v604 = vunpack.c.h.b16 %v217
    %v605 = vunpack.c.l.b16 %v218
    %v606 = vunpack.c.h.b16 %v218
    %v607 = vunpack.c.l.b16 %v219
    %v608 = vunpack.c.h.b16 %v219
    %v609 = vunpack.c.l.b16 %v220
    %v610 = vunpack.c.h.b16 %v220
    %v611 = vpack.c.b16 %v357, %v355
    %v612 = vpack.c.b16 %v358, %v356
    %v613 = vpack.c.b16 %v361, %v359
    %v614 = vpack.c.b16 %v362, %v360
    %v615 = vpack.c.b16 %v365, %v363
    %v616 = vpack.c.b16 %v366, %v364
    %v617 = vpack.c.b16 %v369, %v367
    %v618 = vpack.c.b16 %v370, %v368
    %v619 = vpack.c.b16 %v373, %v371
    %v620 = vpack.c.b16 %v374, %v372
    %v621 = vpack.c.b16 %v377, %v375
    %v622 = vpack.c.b16 %v378, %v376
    %v623 = vpack.c.b16 %v381, %v379
    %v624 = vpack.c.b16 %v382, %v380
    %v625 = vpack.c.b16 %v385, %v383
    %v626 = vpack.c.b16 %v386, %v384
    %v627 = vpack.c.b16 %v389, %v387
    %v628 = vpack.c.b16 %v390, %v388
    %v629 = vpack.c.b16 %v393, %v391
    %v630 = vpack.c.b16 %v394, %v392
    %v631 = vpack.c.b16 %v397, %v395
    %v632 = vpack.c.b16 %v398, %v396
    %v633 = vpack.c.b16 %v401, %v399
    %v634 = vpack.c.b16 %v402, %v400
    %v635 = vpack.c.b16 %v405, %v403
    %v636 = vpack.c.b16 %v406, %v404
    %v637 = vpack.c.b16 %v409, %v407
    %v638 = vpack.c.b16 %v410, %v408
    %v639 = vpack.c.b16 %v413, %v411
    %v640 = vpack.c.b16 %v414, %v412
    %v641 = vpack.c.b16 %v417, %v415
    %v642 = vpack.c.b16 %v418, %v416
    %v643 = vpack.c.b16 %v421, %v419
    %v644 = vpack.c.b16 %v422, %v420
    %v645 = vpack.c.b16 %v425, %v423
    %v646 = vpack.c.b16 %v426, %v424
    %v647 = vpack.c.b16 %v429, %v427
    %v648 = vpack.c.b16 %v430, %v428
    %v649 = vpack.c.b16 %v433, %v431
    %v650 = vpack.c.b16 %v434, %v432
    %v651 = vpack.c.b16 %v437, %v435
    %v652 = vpack.c.b16 %v438, %v436
    %v653 = vpack.c.b16 %v441, %v439
    %v654 = vpack.c.b16 %v442, %v440
    %v655 = vpack.c.b16 %v445, %v443
    %v656 = vpack.c.b16 %v446, %v444
    %v657 = vpack.c.b16 %v449, %v447
    %v658 = vpack.c.b16 %v450, %v448
    %v659 = vpack.c.b16 %v453, %v451
    %v660 = vpack.c.b16 %v454, %v452
    %v661 = vpack.c.b16 %v457, %v455
    %v662 = vpack.c.b16 %v458, %v456
    %v663 = vpack.c.b16 %v461, %v459
    %v664 = vpack.c.b16 %v462, %v460
    %v665 = vpack.c.b16 %v465, %v463
    %v666 = vpack.c.b16 %v466, %v464
    %v667 = vpack.c.b16 %v469, %v467
    %v668 = vpack.c.b16 %v470, %v468
    %v669 = vpack.c.b16 %v473, %v471
    %v670 = vpack.c.b16 %v474, %v472
    %v671 = vpack.c.b16 %v477, %v475
    %v672 = vpack.c.b16 %v478, %v476
    %v673 = vpack.c.b16 %v481, %v479
    %v674 = vpack.c.b16 %v482, %v480
    %v675 = vpack.c.b16 %v485, %v483
    %v676 = vpack.c.b16 %v486, %v484
    %v677 = vpack.c.b16 %v489, %v487
    %v678 = vpack.c.b16 %v490, %v488
    %v679 = vpack.c.b16 %v493, %v491
    %v680 = vpack.c.b16 %v494, %v492
    %v681 = vpack.c.b16 %v497, %v495
    %v682 = vpack.c.b16 %v498, %v496
    %v683 = vpack.c.b16 %v501, %v499
    %v684 = vpack.c.b16 %v502, %v500
    %v685 = vpack.c.b16 %v505, %v503
    %v686 = vpack.c.b16 %v506, %v504
    %v687 = vpack.c.b16 %v509, %v507
    %v688 = vpack.c.b16 %v510, %v508
    %v689 = vpack.c.b16 %v513, %v511
    %v690 = vpack.c.b16 %v514, %v512
    %v691 = vpack.c.b16 %v517, %v515
    %v692 = vpack.c.b16 %v518, %v516
    %v693 = vpack.c.b16 %v521, %v519
    %v694 = vpack.c.b16 %v522, %v520
    %v695 = vpack.c.b16 %v525, %v523
    %v696 = vpack.c.b16 %v526, %v524
    %v697 = vpack.c.b16 %v529, %v527
    %v698 = vpack.c.b16 %v530, %v528
    %v699 = vpack.c.b16 %v533, %v531
    %v700 = vpack.c.b16 %v534, %v532
    %v701 = vpack.c.b16 %v537, %v535
    %v702 = vpack.c.b16 %v538, %v536
    %v703 = vpack.c.b16 %v541, %v539
    %v704 = vpack.c.b16 %v542, %v540
    %v705 = vpack.c.b16 %v545, %v543
    %v706 = vpack.c.b16 %v546, %v544
    %v707 = vpack.c.b16 %v549, %v547
    %v708 = vpack.c.b16 %v550, %v548
    %v709 = vpack.c.b16 %v553, %v551
    %v710 = vpack.c.b16 %v554, %v552
    %v711 = vpack.c.b16 %v557, %v555
    %v712 = vpack.c.b16 %v558, %v556
    %v713 = vpack.c.b16 %v561, %v559
    %v714 = vpack.c.b16 %v562, %v560
    %v715 = vpack.c.b16 %v565, %v563
    %v716 = vpack.c.b16 %v566, %v564
    %v717 = vpack.c.b16 %v569, %v567
    %v718 = vpack.c.b16 %v570, %v568
    %v719 = vpack.c.b16 %v573, %v571
    %v720 = vpack.c.b16 %v574, %v572
    %v721 = vpack.c.b16 %v577, %v575
    %v722 = vpack.c.b16 %v578, %v576
    %v723 = vpack.c.b16 %v581, %v579
    %v724 = vpack.c.b16 %v582, %v580
    %v725 = vpack.c.b16 %v585, %v583
    %v726 = vpack.c.b16 %v586, %v584
    %v727 = vpack.c.b16 %v589, %v587
    %v728 = vpack.c.b16 %v590, %v588
    %v729 = vpack.c.b16 %v593, %v591
    %v730 = vpack.c.b16 %v594, %v592
    %v731 = vpack.c.b16 %v597, %v595
    %v732 = vpack.c.b16 %v598, %v596
    %v733 = vpack.c.b16 %v601, %v599
    %v734 = vpack.c.b16 %v602, %v600
    %v735 = vpack.c.b16 %v605, %v603
    %v736 = vpack.c.b16 %v606, %v604
    %v737 = vpack.c.b16 %v609, %v607
    %v738 = vpack.c.b16 %v610, %v608
    %867 = vmatpush.bf16.msra.mxu0 %v625
    %868 = vmatpush.bf16.msra.mxu0 %v623
    %869 = vmatpush.bf16.msra.mxu0 %v621
    %870 = vmatpush.bf16.msra.mxu0 %v619
    %871 = vmatpush.bf16.msra.mxu0 %v617
    %872 = vmatpush.bf16.msra.mxu0 %v615
    %873 = vmatpush.bf16.msra.mxu0 %v613
    %874 = vmatpush.bf16.msra.mxu0 %v611
    %875 = vmatmul.bf16.gmra.mxu0 %v85
    %v876 = vpop.f32.mrf.mxu0
    %v877 = vadd.f32 %v223, %v876
    %v878 = vpop.f32.mrf.mxu0
    %879 = vdwg.mxu0
    %880 = vmatpush.bf16.msra.mxu0 %v641
    %881 = vmatpush.bf16.msra.mxu0 %v639
    %882 = vmatpush.bf16.msra.mxu0 %v637
    %883 = vmatpush.bf16.msra.mxu0 %v635
    %884 = vmatpush.bf16.msra.mxu0 %v633
    %885 = vmatpush.bf16.msra.mxu0 %v631
    %886 = vmatpush.bf16.msra.mxu0 %v629
    %887 = vmatpush.bf16.msra.mxu0 %v627
    %888 = vmatmul.bf16.gmra.mxu0 %v86
    %v889 = vpop.f32.mrf.mxu0
    %v890 = vadd.f32 %v877, %v889
    %v891 = vpop.f32.mrf.mxu0
    %892 = vdwg.mxu0
    %893 = vmatpush.bf16.msra.mxu0 %v657
    %894 = vmatpush.bf16.msra.mxu0 %v655
    %895 = vmatpush.bf16.msra.mxu0 %v653
    %896 = vmatpush.bf16.msra.mxu0 %v651
    %897 = vmatpush.bf16.msra.mxu0 %v649
    %898 = vmatpush.bf16.msra.mxu0 %v647
    %899 = vmatpush.bf16.msra.mxu0 %v645
    %900 = vmatpush.bf16.msra.mxu0 %v643
    %901 = vmatmul.bf16.gmra.mxu0 %v87
    %v902 = vpop.f32.mrf.mxu0
    %v903 = vadd.f32 %v890, %v902
    %v904 = vpop.f32.mrf.mxu0
    %905 = vdwg.mxu0
    %906 = vmatpush.bf16.msra.mxu0 %v673
    %907 = vmatpush.bf16.msra.mxu0 %v671
    %908 = vmatpush.bf16.msra.mxu0 %v669
    %909 = vmatpush.bf16.msra.mxu0 %v667
    %910 = vmatpush.bf16.msra.mxu0 %v665
    %911 = vmatpush.bf16.msra.mxu0 %v663
    %912 = vmatpush.bf16.msra.mxu0 %v661
    %913 = vmatpush.bf16.msra.mxu0 %v659
    %914 = vmatmul.bf16.gmra.mxu0 %v88
    %v915 = vpop.f32.mrf.mxu0
    %v916 = vadd.f32 %v903, %v915
    %v917 = vpop.f32.mrf.mxu0
    %918 = vdwg.mxu0
    %919 = vmatpush.bf16.msra.mxu0 %v689
    %920 = vmatpush.bf16.msra.mxu0 %v687
    %921 = vmatpush.bf16.msra.mxu0 %v685
    %922 = vmatpush.bf16.msra.mxu0 %v683
    %923 = vmatpush.bf16.msra.mxu0 %v681
    %924 = vmatpush.bf16.msra.mxu0 %v679
    %925 = vmatpush.bf16.msra.mxu0 %v677
    %926 = vmatpush.bf16.msra.mxu0 %v675
    %927 = vmatmul.bf16.gmra.mxu0 %v89
    %v928 = vpop.f32.mrf.mxu0
    %v929 = vadd.f32 %v916, %v928
    %v930 = vpop.f32.mrf.mxu0
    %931 = vdwg.mxu0
    %932 = vmatpush.bf16.msra.mxu0 %v705
    %933 = vmatpush.bf16.msra.mxu0 %v703
    %934 = vmatpush.bf16.msra.mxu0 %v701
    %935 = vmatpush.bf16.msra.mxu0 %v699
    %936 = vmatpush.bf16.msra.mxu0 %v697
    %937 = vmatpush.bf16.msra.mxu0 %v695
    %938 = vmatpush.bf16.msra.mxu0 %v693
    %939 = vmatpush.bf16.msra.mxu0 %v691
    %940 = vmatmul.bf16.gmra.mxu0 %v90
    %v941 = vpop.f32.mrf.mxu0
    %v942 = vadd.f32 %v929, %v941
    %v943 = vpop.f32.mrf.mxu0
    %944 = vdwg.mxu0
    %945 = vmatpush.bf16.msra.mxu0 %v721
    %946 = vmatpush.bf16.msra.mxu0 %v719
    %947 = vmatpush.bf16.msra.mxu0 %v717
    %948 = vmatpush.bf16.msra.mxu0 %v715
    %949 = vmatpush.bf16.msra.mxu0 %v713
    %950 = vmatpush.bf16.msra.mxu0 %v711
    %951 = vmatpush.bf16.msra.mxu0 %v709
    %952 = vmatpush.bf16.msra.mxu0 %v707
    %953 = vmatmul.bf16.gmra.mxu0 %v91
    %v954 = vpop.f32.mrf.mxu0
    %v955 = vadd.f32 %v942, %v954
    %v956 = vpop.f32.mrf.mxu0
    %957 = vdwg.mxu0
    %958 = vmatpush.bf16.msra.mxu0 %v737
    %959 = vmatpush.bf16.msra.mxu0 %v735
    %960 = vmatpush.bf16.msra.mxu0 %v733
    %961 = vmatpush.bf16.msra.mxu0 %v731
    %962 = vmatpush.bf16.msra.mxu0 %v729
    %963 = vmatpush.bf16.msra.mxu0 %v727
    %964 = vmatpush.bf16.msra.mxu0 %v725
    %965 = vmatpush.bf16.msra.mxu0 %v723
    %966 = vmatmul.bf16.gmra.mxu0 %v92
    %v967 = vpop.f32.mrf.mxu0
    %v968 = vadd.f32 %v955, %v967
    %v969 = vpop.f32.mrf.mxu0
    %970 = vdwg.mxu0
    %971 = vmatpush.bf16.msra.mxu0 %v626
    %972 = vmatpush.bf16.msra.mxu0 %v624
    %973 = vmatpush.bf16.msra.mxu0 %v622
    %974 = vmatpush.bf16.msra.mxu0 %v620
    %975 = vmatpush.bf16.msra.mxu0 %v618
    %976 = vmatpush.bf16.msra.mxu0 %v616
    %977 = vmatpush.bf16.msra.mxu0 %v614
    %978 = vmatpush.bf16.msra.mxu0 %v612
    %979 = vmatmul.bf16.gmra.mxu0 %v85
    %v980 = vpop.f32.mrf.mxu0
    %v981 = vadd.f32 %v224, %v980
    %v982 = vpop.f32.mrf.mxu0
    %983 = vdwg.mxu0
    %984 = vmatpush.bf16.msra.mxu0 %v642
    %985 = vmatpush.bf16.msra.mxu0 %v640
    %986 = vmatpush.bf16.msra.mxu0 %v638
    %987 = vmatpush.bf16.msra.mxu0 %v636
    %988 = vmatpush.bf16.msra.mxu0 %v634
    %989 = vmatpush.bf16.msra.mxu0 %v632
    %990 = vmatpush.bf16.msra.mxu0 %v630
    %991 = vmatpush.bf16.msra.mxu0 %v628
    %992 = vmatmul.bf16.gmra.mxu0 %v86
    %v993 = vpop.f32.mrf.mxu0
    %v994 = vadd.f32 %v981, %v993
    %v995 = vpop.f32.mrf.mxu0
    %996 = vdwg.mxu0
    %997 = vmatpush.bf16.msra.mxu0 %v658
    %998 = vmatpush.bf16.msra.mxu0 %v656
    %999 = vmatpush.bf16.msra.mxu0 %v654
    %1000 = vmatpush.bf16.msra.mxu0 %v652
    %1001 = vmatpush.bf16.msra.mxu0 %v650
    %1002 = vmatpush.bf16.msra.mxu0 %v648
    %1003 = vmatpush.bf16.msra.mxu0 %v646
    %1004 = vmatpush.bf16.msra.mxu0 %v644
    %1005 = vmatmul.bf16.gmra.mxu0 %v87
    %v1006 = vpop.f32.mrf.mxu0
    %v1007 = vadd.f32 %v994, %v1006
    %v1008 = vpop.f32.mrf.mxu0
    %1009 = vdwg.mxu0
    %1010 = vmatpush.bf16.msra.mxu0 %v674
    %1011 = vmatpush.bf16.msra.mxu0 %v672
    %1012 = vmatpush.bf16.msra.mxu0 %v670
    %1013 = vmatpush.bf16.msra.mxu0 %v668
    %1014 = vmatpush.bf16.msra.mxu0 %v666
    %1015 = vmatpush.bf16.msra.mxu0 %v664
    %1016 = vmatpush.bf16.msra.mxu0 %v662
    %1017 = vmatpush.bf16.msra.mxu0 %v660
    %1018 = vmatmul.bf16.gmra.mxu0 %v88
    %v1019 = vpop.f32.mrf.mxu0
    %v1020 = vadd.f32 %v1007, %v1019
    %v1021 = vpop.f32.mrf.mxu0
    %1022 = vdwg.mxu0
    %1023 = vmatpush.bf16.msra.mxu0 %v690
    %1024 = vmatpush.bf16.msra.mxu0 %v688
    %1025 = vmatpush.bf16.msra.mxu0 %v686
    %1026 = vmatpush.bf16.msra.mxu0 %v684
    %1027 = vmatpush.bf16.msra.mxu0 %v682
    %1028 = vmatpush.bf16.msra.mxu0 %v680
    %1029 = vmatpush.bf16.msra.mxu0 %v678
    %1030 = vmatpush.bf16.msra.mxu0 %v676
    %1031 = vmatmul.bf16.gmra.mxu0 %v89
    %v1032 = vpop.f32.mrf.mxu0
    %v1033 = vadd.f32 %v1020, %v1032
    %v1034 = vpop.f32.mrf.mxu0
    %1035 = vdwg.mxu0
    %1036 = vmatpush.bf16.msra.mxu0 %v706
    %1037 = vmatpush.bf16.msra.mxu0 %v704
    %1038 = vmatpush.bf16.msra.mxu0 %v702
    %1039 = vmatpush.bf16.msra.mxu0 %v700
    %1040 = vmatpush.bf16.msra.mxu0 %v698
    %1041 = vmatpush.bf16.msra.mxu0 %v696
    %1042 = vmatpush.bf16.msra.mxu0 %v694
    %1043 = vmatpush.bf16.msra.mxu0 %v692
    %1044 = vmatmul.bf16.gmra.mxu0 %v90
    %v1045 = vpop.f32.mrf.mxu0
    %v1046 = vadd.f32 %v1033, %v1045
    %v1047 = vpop.f32.mrf.mxu0
    %1048 = vdwg.mxu0
    %1049 = vmatpush.bf16.msra.mxu0 %v722
    %1050 = vmatpush.bf16.msra.mxu0 %v720
    %1051 = vmatpush.bf16.msra.mxu0 %v718
    %1052 = vmatpush.bf16.msra.mxu0 %v716
    %1053 = vmatpush.bf16.msra.mxu0 %v714
    %1054 = vmatpush.bf16.msra.mxu0 %v712
    %1055 = vmatpush.bf16.msra.mxu0 %v710
    %1056 = vmatpush.bf16.msra.mxu0 %v708
    %1057 = vmatmul.bf16.gmra.mxu0 %v91
    %v1058 = vpop.f32.mrf.mxu0
    %v1059 = vadd.f32 %v1046, %v1058
    %v1060 = vpop.f32.mrf.mxu0
    %1061 = vdwg.mxu0
    %1062 = vmatpush.bf16.msra.mxu0 %v738
    %1063 = vmatpush.bf16.msra.mxu0 %v736
    %1064 = vmatpush.bf16.msra.mxu0 %v734
    %1065 = vmatpush.bf16.msra.mxu0 %v732
    %1066 = vmatpush.bf16.msra.mxu0 %v730
    %1067 = vmatpush.bf16.msra.mxu0 %v728
    %1068 = vmatpush.bf16.msra.mxu0 %v726
    %1069 = vmatpush.bf16.msra.mxu0 %v724
    %1070 = vmatmul.bf16.gmra.mxu0 %v92
    %v1071 = vpop.f32.mrf.mxu0
    %v1072 = vadd.f32 %v1059, %v1071
    %v1073 = vpop.f32.mrf.mxu0
    %1074 = vdwg.mxu0
    %v1075 = vmax.f32 %v968, 0.0
    %v1076 = vmax.f32 %v1072, 0.0
    %v1077 = vpack.c.bf16 %v1075, %v1075
    %v1078 = vpack.c.bf16 %v1076, %v1076
    %v1079 = vld [vmem:[#allocation7] sm:$0xf]
    %v1080 = vld [vmem:[#allocation7 + $0x4] sm:$0xf]
    %v1081 = vld [vmem:[#allocation7 + $0x8] sm:$0xf]
    %v1082 = vld [vmem:[#allocation7 + $0xc] sm:$0xf]
    %v1083 = vld [vmem:[#allocation7 + $0x10] sm:$0xf]
    %v1084 = vld [vmem:[#allocation7 + $0x14] sm:$0xf]
    %v1085 = vld [vmem:[#allocation7 + $0x18] sm:$0xf]
    %v1086 = vld [vmem:[#allocation7 + $0x1c] sm:$0xf]
    %v1087 = vld [vmem:[#allocation7 + $0x20] sm:$0xf]
    %v1088 = vld [vmem:[#allocation7 + $0x24] sm:$0xf]
    %v1089 = vld [vmem:[#allocation7 + $0x28] sm:$0xf]
    %v1090 = vld [vmem:[#allocation7 + $0x2c] sm:$0xf]
    %v1091 = vld [vmem:[#allocation7 + $0x30] sm:$0xf]
    %v1092 = vld [vmem:[#allocation7 + $0x34] sm:$0xf]
    %v1093 = vld [vmem:[#allocation7 + $0x38] sm:$0xf]
    %v1094 = vld [vmem:[#allocation7 + $0x3c] sm:$0xf]
    %v1095 = vld [vmem:[#allocation7 + $0x40] sm:$0xf]
    %v1096 = vld [vmem:[#allocation7 + $0x44] sm:$0xf]
    %v1097 = vld [vmem:[#allocation7 + $0x48] sm:$0xf]
    %v1098 = vld [vmem:[#allocation7 + $0x4c] sm:$0xf]
    %v1099 = vld [vmem:[#allocation7 + $0x50] sm:$0xf]
    %v1100 = vld [vmem:[#allocation7 + $0x54] sm:$0xf]
    %v1101 = vld [vmem:[#allocation7 + $0x58] sm:$0xf]
    %v1102 = vld [vmem:[#allocation7 + $0x5c] sm:$0xf]
    %v1103 = vld [vmem:[#allocation7 + $0x60] sm:$0xf]
    %v1104 = vld [vmem:[#allocation7 + $0x64] sm:$0xf]
    %v1105 = vld [vmem:[#allocation7 + $0x68] sm:$0xf]
    %v1106 = vld [vmem:[#allocation7 + $0x6c] sm:$0xf]
    %v1107 = vld [vmem:[#allocation7 + $0x70] sm:$0xf]
    %v1108 = vld [vmem:[#allocation7 + $0x74] sm:$0xf]
    %v1109 = vld [vmem:[#allocation7 + $0x78] sm:$0xf]
    %v1110 = vld [vmem:[#allocation7 + $0x7c] sm:$0xf]
    %v1111 = vld [vmem:[#allocation8 + $0x2] sm:$0x1]
    %v1113 = vperm.slane %v1111, 0
    %v1147 = vunpack.c.l.b16 %v1079
    %v1148 = vunpack.c.l.b16 %v1080
    %v1149 = vunpack.c.l.b16 %v1081
    %v1150 = vunpack.c.l.b16 %v1082
    %v1151 = vunpack.c.l.b16 %v1083
    %v1152 = vunpack.c.l.b16 %v1084
    %v1153 = vunpack.c.l.b16 %v1085
    %v1154 = vunpack.c.l.b16 %v1086
    %v1155 = vunpack.c.l.b16 %v1087
    %v1156 = vunpack.c.l.b16 %v1088
    %v1157 = vunpack.c.l.b16 %v1089
    %v1158 = vunpack.c.l.b16 %v1090
    %v1159 = vunpack.c.l.b16 %v1091
    %v1160 = vunpack.c.l.b16 %v1092
    %v1161 = vunpack.c.l.b16 %v1093
    %v1162 = vunpack.c.l.b16 %v1094
    %v1163 = vunpack.c.l.b16 %v1095
    %v1164 = vunpack.c.l.b16 %v1096
    %v1165 = vunpack.c.l.b16 %v1097
    %v1166 = vunpack.c.l.b16 %v1098
    %v1167 = vunpack.c.l.b16 %v1099
    %v1168 = vunpack.c.l.b16 %v1100
    %v1169 = vunpack.c.l.b16 %v1101
    %v1170 = vunpack.c.l.b16 %v1102
    %v1171 = vunpack.c.l.b16 %v1103
    %v1172 = vunpack.c.l.b16 %v1104
    %v1173 = vunpack.c.l.b16 %v1105
    %v1174 = vunpack.c.l.b16 %v1106
    %v1175 = vunpack.c.l.b16 %v1107
    %v1176 = vunpack.c.l.b16 %v1108
    %v1177 = vunpack.c.l.b16 %v1109
    %v1178 = vunpack.c.l.b16 %v1110
    %v1179 = vpack.c.b16 %v1148, %v1147
    %v1180 = vpack.c.b16 %v1150, %v1149
    %v1181 = vpack.c.b16 %v1152, %v1151
    %v1182 = vpack.c.b16 %v1154, %v1153
    %v1183 = vpack.c.b16 %v1156, %v1155
    %v1184 = vpack.c.b16 %v1158, %v1157
    %v1185 = vpack.c.b16 %v1160, %v1159
    %v1186 = vpack.c.b16 %v1162, %v1161
    %v1187 = vpack.c.b16 %v1164, %v1163
    %v1188 = vpack.c.b16 %v1166, %v1165
    %v1189 = vpack.c.b16 %v1168, %v1167
    %v1190 = vpack.c.b16 %v1170, %v1169
    %v1191 = vpack.c.b16 %v1172, %v1171
    %v1192 = vpack.c.b16 %v1174, %v1173
    %v1193 = vpack.c.b16 %v1176, %v1175
    %v1194 = vpack.c.b16 %v1178, %v1177
    %1211 = vmatpush.bf16.msra.mxu0 %v1186
    %1212 = vmatpush.bf16.msra.mxu0 %v1185
    %1213 = vmatpush.bf16.msra.mxu0 %v1184
    %1214 = vmatpush.bf16.msra.mxu0 %v1183
    %1215 = vmatpush.bf16.msra.mxu0 %v1182
    %1216 = vmatpush.bf16.msra.mxu0 %v1181
    %1217 = vmatpush.bf16.msra.mxu0 %v1180
    %1218 = vmatpush.bf16.msra.mxu0 %v1179
    %1219 = vmatmul.bf16.gmra.mxu0 %v1077
    %v1220 = vpop.f32.mrf.mxu0
    %v1221 = vadd.f32 %v1113, %v1220
    %v1222 = vpop.f32.mrf.mxu0
    %1223 = vdwg.mxu0
    %1224 = vmatpush.bf16.msra.mxu0 %v1194
    %1225 = vmatpush.bf16.msra.mxu0 %v1193
    %1226 = vmatpush.bf16.msra.mxu0 %v1192
    %1227 = vmatpush.bf16.msra.mxu0 %v1191
    %1228 = vmatpush.bf16.msra.mxu0 %v1190
    %1229 = vmatpush.bf16.msra.mxu0 %v1189
    %1230 = vmatpush.bf16.msra.mxu0 %v1188
    %1231 = vmatpush.bf16.msra.mxu0 %v1187
    %1232 = vmatmul.bf16.gmra.mxu0 %v1078
    %v1233 = vpop.f32.mrf.mxu0
    %v1234 = vadd.f32 %v1221, %v1233
    %v1235 = vpop.f32.mrf.mxu0
    %1236 = vdwg.mxu0
    %v1237 = vxor.u32 %v1234, 2147483648
    %v1238 = vmul.f32 %v1237, 1.442695
    %v1239 = vpow.pop %v1238
    %v1240 = vadd.f32 %v1239, 1.0
    %v1241 = vrcp.pop %v1240
    %v1242 = vmul.f32 %v1240, %v1241
    %v1243 = vsub.f32 1.0, %v1242
    %v1244 = vmul.f32 %v1241, %v1243
    %v1245 = vadd.f32 %v1241, %v1244
    %vm1246 = vweird.f32 %v1240
    %vm1247 = vweird.f32 %v1241
    %vm1248 = vmor %vm1246, %vm1247
    %v1249 = vsel %vm1248, %v1241, %v1245
    %v1250 = vand.u32 2147483647, %v1240
    %vm1251 = vcmp.eq.f32.partialorder %v1250, 8.507059e+37
    %v1252 = vand.u32 %v1240, 2147483648
    %v1253 = vor.u32 1.1754944e-38, %v1252
    %v1254 = vsel %vm1251, %v1253, %v1249
    %v1255 = vmul.f32 1.0, %v1254
    %v1256 = vpack.c.bf16 %v1255, %v1255
    %1257 = vst [vmem:[#allocation10] sm:$0xf] %v1256
    // Predicated region
    $region34: #{tpu_custom_call.1} parent=1 // pred_check
      _
    $region35: #{tpu_custom_call.1} parent=1 // pred_check_branch
      %1259 = sbr.rel (0) target = $region37
    $region36: #{tpu_custom_call.1} parent=1 // pred_region
      %1261 = vsyncadd [#allocation4], 0
      %s1263 = sshll.u32 [#allocation10], 4
      %s1264 = int_to_ptr.vmem [resolvable:$true] %s1263
      %s1265 = sshll.u32 %s4, 4
      %s1266 = int_to_ptr.hbm [resolvable:$true] %s1265
      %1268 = dma.vmem_to_hbm [thread:$0]  %s1264, 64, %s1266, [#allocation4]
    $region37: #{tpu_custom_call.1} parent=1 // pred_fallthru
      _
    // Predicated region
    $region38: #{tpu_custom_call.1} parent=1 // pred_check
      _
    $region39: #{tpu_custom_call.1} parent=1 // pred_check_branch
      %1270 = sbr.rel (0) target = $region41
    $region40: #{tpu_custom_call.1} parent=1 // pred_region
      %1272 = dma.done [#allocation4], 64
    $region41: #{tpu_custom_call.1} parent=1 // pred_fallthru
      _
    %1273 = vsyncpa [#allocation3], 1
    %1274 = vsyncpa [#allocation6], 1
    %1275 = vsyncpa [#allocation9], 1
    %1276 = vsyncpa [#allocation4], 1

// kernel: tpu_custom_call.1
$region0: #{tpu_custom_call.1}
  #allocation0 [shape = 'u32[]', space=smem, size = 0x4, offset = 0x4, fixed_abs, tag = 'smem constant byte address 0x4 - core index']
  #allocation1 [shape = 'u32[72,128]{1,0:T(1,128)}', space=vmem, size = 0x9000, scoped, tag = 'internal scratch']
  %s0 = inlined_call_operand.hbm [shape: f32[8,1024], index: 0, kind: input, shape index: {}]
  %s1 = inlined_call_operand.hbm [shape: bf16[1024,256], index: 1, kind: input, shape index: {}]
  %s2 = inlined_call_operand.hbm [shape: bf16[256,128], index: 2, kind: input, shape index: {}]
  %s3 = inlined_call_operand.hbm [shape: f32[1,384], index: 3, kind: input, shape index: {}]
  %s4 = inlined_call_operand.hbm [shape: bf16[8,128], index: 4, kind: output, shape index: {}]
  %s5 = sld [smem:[#allocation0]]
  $region42: #{tpu_custom_call.1} parent=0
    _
  %s7 = ssub.s32 1, %s5
  %s8 = scalar_select 0, %s7, %s5
  $region1: #{tpu_custom_call.1} parent=0
    #allocation2 [shape = 'u8[32768]{0}', space=vmem, size = 0x8000, scoped, tag = 'input window, operand 0, single buffered']
    #allocation3 [shape = 's32[1]{0}', space=sflag, size = 0x4, scoped, tag = 'scoped memory for tpu_custom_call.1']
    #allocation4 [shape = 's32[1]{0}', space=sflag, size = 0x4, scoped, tag = 'scoped memory for tpu_custom_call.1']
    #allocation5 [shape = 'u8[524288]{0}', space=vmem, size = 0x80000, scoped, tag = 'input window, operand 1, single buffered']
    #allocation6 [shape = 's32[1]{0}', space=sflag, size = 0x4, scoped, tag = 'scoped memory for tpu_custom_call.1']
    #allocation7 [shape = 'u8[65536]{0}', space=vmem, size = 0x10000, scoped, tag = 'input window, operand 2, single buffered']
    #allocation8 [shape = 'u8[1536]{0}', space=vmem, size = 0x800, scoped, tag = 'input window, operand 3, single buffered']
    #allocation9 [shape = 's32[1]{0}', space=sflag, size = 0x4, scoped, tag = 'scoped memory for tpu_custom_call.1']
    #allocation10 [shape = 'u8[2048]{0}', space=vmem, size = 0x800, scoped, tag = 'output window, operand 0, single buffered']
    %9 = vsyncpa [#allocation3], 0
    %10 = vsyncpa [#allocation6], 0
    %11 = vsyncpa [#allocation9], 0
    %12 = vsyncpa [#allocation4], 0
    // Predicated region
    $region2: #{tpu_custom_call.1} parent=1 // pred_check
      _
    $region3: #{tpu_custom_call.1} parent=1 // pred_check_branch
      %14 = sbr.rel (0) target = $region5
    $region4: #{tpu_custom_call.1} parent=1 // pred_region
      %16 = vsyncadd [#allocation3], 0
      %s18 = sshll.u32 %s0, 4
      %s19 = int_to_ptr.hbm [resolvable:$true] %s18
      %s20 = sshll.u32 [#allocation2], 4
      %s21 = int_to_ptr.vmem [resolvable:$true] %s20
      %23 = dma.hbm_to_vmem [thread:$0]  %s19, 1024, %s21, [#allocation3]
    $region5: #{tpu_custom_call.1} parent=1 // pred_fallthru
      _
    // Predicated region
    $region6: #{tpu_custom_call.1} parent=1 // pred_check
      _
    $region7: #{tpu_custom_call.1} parent=1 // pred_check_branch
      %25 = sbr.rel (0) target = $region9
    $region8: #{tpu_custom_call.1} parent=1 // pred_region
      %27 = vsyncadd [#allocation6], 0
      %s28 = sshll.u32 %s1, 4
      %s29 = int_to_ptr.hbm [resolvable:$true] %s28
      %s30 = sshll.u32 [#allocation5], 4
      %s31 = int_to_ptr.vmem [resolvable:$true] %s30
      %36 = dma.hbm_to_vmem [thread:$0]  %s29, 16384, %s31, [#allocation6], 128, 128, 8
    $region9: #{tpu_custom_call.1} parent=1 // pred_fallthru
      _
    // Predicated region
    $region10: #{tpu_custom_call.1} parent=1 // pred_check
      _
    $region11: #{tpu_custom_call.1} parent=1 // pred_check_branch
      %38 = sbr.rel (0) target = $region13
    $region12: #{tpu_custom_call.1} parent=1 // pred_region
      %40 = vsyncadd [#allocation6], 0
      %s41 = sshll.u32 %s2, 4
      %s42 = int_to_ptr.hbm [resolvable:$true] %s41
      %s43 = sshll.u32 [#allocation7], 4
      %s44 = int_to_ptr.vmem [resolvable:$true] %s43
      %49 = dma.hbm_to_vmem [thread:$0]  %s42, 2048, %s44, [#allocation6], 64, 64, 4
    $region13: #{tpu_custom_call.1} parent=1 // pred_fallthru
      _
    // Predicated region
    $region14: #{tpu_custom_call.1} parent=1 // pred_check
      _
    $region15: #{tpu_custom_call.1} parent=1 // pred_check_branch
      %51 = sbr.rel (0) target = $region17
    $region16: #{tpu_custom_call.1} parent=1 // pred_region
      %53 = vsyncadd [#allocation9], 0
      %s55 = sshll.u32 %s3, 4
      %s56 = int_to_ptr.hbm [resolvable:$true] %s55
      %s57 = sshll.u32 [#allocation8], 4
      %s58 = int_to_ptr.vmem [resolvable:$true] %s57
      %60 = dma.hbm_to_vmem [thread:$0]  %s56, 48, %s58, [#allocation9]
    $region17: #{tpu_custom_call.1} parent=1 // pred_fallthru
      _
    // Predicated region
    $region18: #{tpu_custom_call.1} parent=1 // pred_check
      _
    $region19: #{tpu_custom_call.1} parent=1 // pred_check_branch
      %62 = sbr.rel (0) target = $region21
    $region20: #{tpu_custom_call.1} parent=1 // pred_region
      %64 = dma.done [#allocation3], 1024
    $region21: #{tpu_custom_call.1} parent=1 // pred_fallthru
      _
    // Predicated region
    $region22: #{tpu_custom_call.1} parent=1 // pred_check
      _
    $region23: #{tpu_custom_call.1} parent=1 // pred_check_branch
      %66 = sbr.rel (0) target = $region25
    $region24: #{tpu_custom_call.1} parent=1 // pred_region
      %68 = dma.done [#allocation6], 16384
    $region25: #{tpu_custom_call.1} parent=1 // pred_fallthru
      _
    // Predicated region
    $region26: #{tpu_custom_call.1} parent=1 // pred_check
      _
    $region27: #{tpu_custom_call.1} parent=1 // pred_check_branch
      %70 = sbr.rel (0) target = $region29
    $region28: #{tpu_custom_call.1} parent=1 // pred_region
      %72 = dma.done [#allocation6], 2048
    $region29: #{tpu_custom_call.1} parent=1 // pred_fallthru
      _
    // Predicated region
    $region30: #{tpu_custom_call.1} parent=1 // pred_check
      _
    $region31: #{tpu_custom_call.1} parent=1 // pred_check_branch
      %74 = sbr.rel (0) target = $region33
    $region32: #{tpu_custom_call.1} parent=1 // pred_region
      %76 = dma.done [#allocation9], 48
    $region33: #{tpu_custom_call.1} parent=1 // pred_fallthru
      _
    %v77 = vld [vmem:[#allocation2] sm:$0xff]
    %v78 = vld [vmem:[#allocation2 + $0x8] sm:$0xff]
    %v79 = vld [vmem:[#allocation2 + $0x10] sm:$0xff]
    %v80 = vld [vmem:[#allocation2 + $0x18] sm:$0xff]
    %v81 = vld [vmem:[#allocation2 + $0x20] sm:$0xff]
    %v82 = vld [vmem:[#allocation2 + $0x28] sm:$0xff]
    %v83 = vld [vmem:[#allocation2 + $0x30] sm:$0xff]
    %v84 = vld [vmem:[#allocation2 + $0x38] sm:$0xff]
    %v85 = vpack.c.bf16 %v77, %v77
    %v86 = vpack.c.bf16 %v78, %v78
    %v87 = vpack.c.bf16 %v79, %v79
    %v88 = vpack.c.bf16 %v80, %v80
    %v89 = vpack.c.bf16 %v81, %v81
    %v90 = vpack.c.bf16 %v82, %v82
    %v91 = vpack.c.bf16 %v83, %v83
    %v92 = vpack.c.bf16 %v84, %v84
    %v93 = vld [vmem:[#allocation5] sm:$0xff]
    %v94 = vld [vmem:[#allocation5 + $0x8] sm:$0xff]
    %v95 = vld [vmem:[#allocation5 + $0x10] sm:$0xff]
    %v96 = vld [vmem:[#allocation5 + $0x18] sm:$0xff]
    %v97 = vld [vmem:[#allocation5 + $0x20] sm:$0xff]
    %v98 = vld [vmem:[#allocation5 + $0x28] sm:$0xff]
    %v99 = vld [vmem:[#allocation5 + $0x30] sm:$0xff]
    %v100 = vld [vmem:[#allocation5 + $0x38] sm:$0xff]
    %v101 = vld [vmem:[#allocation5 + $0x40] sm:$0xff]
    %v102 = vld [vmem:[#allocation5 + $0x48] sm:$0xff]
    %v103 = vld [vmem:[#allocation5 + $0x50] sm:$0xff]
    %v104 = vld [vmem:[#allocation5 + $0x58] sm:$0xff]
    %v105 = vld [vmem:[#allocation5 + $0x60] sm:$0xff]
    %v106 = vld [vmem:[#allocation5 + $0x68] sm:$0xff]
    %v107 = vld [vmem:[#allocation5 + $0x70] sm:$0xff]
    %v108 = vld [vmem:[#allocation5 + $0x78] sm:$0xff]
    %v109 = vld [vmem:[#allocation5 + $0x80] sm:$0xff]
    %v110 = vld [vmem:[#allocation5 + $0x88] sm:$0xff]
    %v111 = vld [vmem:[#allocation5 + $0x90] sm:$0xff]
    %v112 = vld [vmem:[#allocation5 + $0x98] sm:$0xff]
    %v113 = vld [vmem:[#allocation5 + $0xa0] sm:$0xff]
    %v114 = vld [vmem:[#allocation5 + $0xa8] sm:$0xff]
    %v115 = vld [vmem:[#allocation5 + $0xb0] sm:$0xff]
    %v116 = vld [vmem:[#allocation5 + $0xb8] sm:$0xff]
    %v117 = vld [vmem:[#allocation5 + $0xc0] sm:$0xff]
    %v118 = vld [vmem:[#allocation5 + $0xc8] sm:$0xff]
    %v119 = vld [vmem:[#allocation5 + $0xd0] sm:$0xff]
    %v120 = vld [vmem:[#allocation5 + $0xd8] sm:$0xff]
    %v121 = vld [vmem:[#allocation5 + $0xe0] sm:$0xff]
    %v122 = vld [vmem:[#allocation5 + $0xe8] sm:$0xff]
    %v123 = vld [vmem:[#allocation5 + $0xf0] sm:$0xff]
    %v124 = vld [vmem:[#allocation5 + $0xf8] sm:$0xff]
    %v125 = vld [vmem:[#allocation5 + $0x100] sm:$0xff]
    %v126 = vld [vmem:[#allocation5 + $0x108] sm:$0xff]
    %v127 = vld [vmem:[#allocation5 + $0x110] sm:$0xff]
    %v128 = vld [vmem:[#allocation5 + $0x118] sm:$0xff]
    %v129 = vld [vmem:[#allocation5 + $0x120] sm:$0xff]
    %v130 = vld [vmem:[#allocation5 + $0x128] sm:$0xff]
    %v131 = vld [vmem:[#allocation5 + $0x130] sm:$0xff]
    %v132 = vld [vmem:[#allocation5 + $0x138] sm:$0xff]
    %v133 = vld [vmem:[#allocation5 + $0x140] sm:$0xff]
    %v134 = vld [vmem:[#allocation5 + $0x148] sm:$0xff]
    %v135 = vld [vmem:[#allocation5 + $0x150] sm:$0xff]
    %v136 = vld [vmem:[#allocation5 + $0x158] sm:$0xff]
    %v137 = vld [vmem:[#allocation5 + $0x160] sm:$0xff]
    %v138 = vld [vmem:[#allocation5 + $0x168] sm:$0xff]
    %v139 = vld [vmem:[#allocation5 + $0x170] sm:$0xff]
    %v140 = vld [vmem:[#allocation5 + $0x178] sm:$0xff]
    %v141 = vld [vmem:[#allocation5 + $0x180] sm:$0xff]
    %v142 = vld [vmem:[#allocation5 + $0x188] sm:$0xff]
    %v143 = vld [vmem:[#allocation5 + $0x190] sm:$0xff]
    %v144 = vld [vmem:[#allocation5 + $0x198] sm:$0xff]
    %v145 = vld [vmem:[#allocation5 + $0x1a0] sm:$0xff]
    %v146 = vld [vmem:[#allocation5 + $0x1a8] sm:$0xff]
    %v147 = vld [vmem:[#allocation5 + $0x1b0] sm:$0xff]
    %v148 = vld [vmem:[#allocation5 + $0x1b8] sm:$0xff]
    %v149 = vld [vmem:[#allocation5 + $0x1c0] sm:$0xff]
    %v150 = vld [vmem:[#allocation5 + $0x1c8] sm:$0xff]
    %v151 = vld [vmem:[#allocation5 + $0x1d0] sm:$0xff]
    %v152 = vld [vmem:[#allocation5 + $0x1d8] sm:$0xff]
    %v153 = vld [vmem:[#allocation5 + $0x1e0] sm:$0xff]
    %v154 = vld [vmem:[#allocation5 + $0x1e8] sm:$0xff]
    %v155 = vld [vmem:[#allocation5 + $0x1f0] sm:$0xff]
    %v156 = vld [vmem:[#allocation5 + $0x1f8] sm:$0xff]
    %v157 = vld [vmem:[#allocation5 + $0x200] sm:$0xff]
    %v158 = vld [vmem:[#allocation5 + $0x208] sm:$0xff]
    %v159 = vld [vmem:[#allocation5 + $0x210] sm:$0xff]
    %v160 = vld [vmem:[#allocation5 + $0x218] sm:$0xff]
    %v161 = vld [vmem:[#allocation5 + $0x220] sm:$0xff]
    %v162 = vld [vmem:[#allocation5 + $0x228] sm:$0xff]
    %v163 = vld [vmem:[#allocation5 + $0x230] sm:$0xff]
    %v164 = vld [vmem:[#allocation5 + $0x238] sm:$0xff]
    %v165 = vld [vmem:[#allocation5 + $0x240] sm:$0xff]
    %v166 = vld [vmem:[#allocation5 + $0x248] sm:$0xff]
    %v167 = vld [vmem:[#allocation5 + $0x250] sm:$0xff]
    %v168 = vld [vmem:[#allocation5 + $0x258] sm:$0xff]
    %v169 = vld [vmem:[#allocation5 + $0x260] sm:$0xff]
    %v170 = vld [vmem:[#allocation5 + $0x268] sm:$0xff]
    %v171 = vld [vmem:[#allocation5 + $0x270] sm:$0xff]
    %v172 = vld [vmem:[#allocation5 + $0x278] sm:$0xff]
    %v173 = vld [vmem:[#allocation5 + $0x280] sm:$0xff]
    %v174 = vld [vmem:[#allocation5 + $0x288] sm:$0xff]
    %v175 = vld [vmem:[#allocation5 + $0x290] sm:$0xff]
    %v176 = vld [vmem:[#allocation5 + $0x298] sm:$0xff]
    %v177 = vld [vmem:[#allocation5 + $0x2a0] sm:$0xff]
    %v178 = vld [vmem:[#allocation5 + $0x2a8] sm:$0xff]
    %v179 = vld [vmem:[#allocation5 + $0x2b0] sm:$0xff]
    %v180 = vld [vmem:[#allocation5 + $0x2b8] sm:$0xff]
    %v181 = vld [vmem:[#allocation5 + $0x2c0] sm:$0xff]
    %v182 = vld [vmem:[#allocation5 + $0x2c8] sm:$0xff]
    %v183 = vld [vmem:[#allocation5 + $0x2d0] sm:$0xff]
    %v184 = vld [vmem:[#allocation5 + $0x2d8] sm:$0xff]
    %v185 = vld [vmem:[#allocation5 + $0x2e0] sm:$0xff]
    %v186 = vld [vmem:[#allocation5 + $0x2e8] sm:$0xff]
    %v187 = vld [vmem:[#allocation5 + $0x2f0] sm:$0xff]
    %v188 = vld [vmem:[#allocation5 + $0x2f8] sm:$0xff]
    %v189 = vld [vmem:[#allocation5 + $0x300] sm:$0xff]
    %v190 = vld [vmem:[#allocation5 + $0x308] sm:$0xff]
    %v191 = vld [vmem:[#allocation5 + $0x310] sm:$0xff]
    %v192 = vld [vmem:[#allocation5 + $0x318] sm:$0xff]
    %v193 = vld [vmem:[#allocation5 + $0x320] sm:$0xff]
    %v194 = vld [vmem:[#allocation5 + $0x328] sm:$0xff]
    %v195 = vld [vmem:[#allocation5 + $0x330] sm:$0xff]
    %v196 = vld [vmem:[#allocation5 + $0x338] sm:$0xff]
    %v197 = vld [vmem:[#allocation5 + $0x340] sm:$0xff]
    %v198 = vld [vmem:[#allocation5 + $0x348] sm:$0xff]
    %v199 = vld [vmem:[#allocation5 + $0x350] sm:$0xff]
    %v200 = vld [vmem:[#allocation5 + $0x358] sm:$0xff]
    %v201 = vld [vmem:[#allocation5 + $0x360] sm:$0xff]
    %v202 = vld [vmem:[#allocation5 + $0x368] sm:$0xff]
    %v203 = vld [vmem:[#allocation5 + $0x370] sm:$0xff]
    %v204 = vld [vmem:[#allocation5 + $0x378] sm:$0xff]
    %v205 = vld [vmem:[#allocation5 + $0x380] sm:$0xff]
    %v206 = vld [vmem:[#allocation5 + $0x388] sm:$0xff]
    %v207 = vld [vmem:[#allocation5 + $0x390] sm:$0xff]
    %v208 = vld [vmem:[#allocation5 + $0x398] sm:$0xff]
    %v209 = vld [vmem:[#allocation5 + $0x3a0] sm:$0xff]
    %v210 = vld [vmem:[#allocation5 + $0x3a8] sm:$0xff]
    %v211 = vld [vmem:[#allocation5 + $0x3b0] sm:$0xff]
    %v212 = vld [vmem:[#allocation5 + $0x3b8] sm:$0xff]
    %v213 = vld [vmem:[#allocation5 + $0x3c0] sm:$0xff]
    %v214 = vld [vmem:[#allocation5 + $0x3c8] sm:$0xff]
    %v215 = vld [vmem:[#allocation5 + $0x3d0] sm:$0xff]
    %v216 = vld [vmem:[#allocation5 + $0x3d8] sm:$0xff]
    %v217 = vld [vmem:[#allocation5 + $0x3e0] sm:$0xff]
    %v218 = vld [vmem:[#allocation5 + $0x3e8] sm:$0xff]
    %v219 = vld [vmem:[#allocation5 + $0x3f0] sm:$0xff]
    %v220 = vld [vmem:[#allocation5 + $0x3f8] sm:$0xff]
    %v221 = vld [vmem:[#allocation8] sm:$0x3]
    %v223 = vperm.slane %v221, 0
    %v224 = vperm.slane %v221, 1
    %v355 = vunpack.c.l.b16 %v93
    %v356 = vunpack.c.h.b16 %v93
    %v357 = vunpack.c.l.b16 %v94
    %v358 = vunpack.c.h.b16 %v94
    %v359 = vunpack.c.l.b16 %v95
    %v360 = vunpack.c.h.b16 %v95
    %v361 = vunpack.c.l.b16 %v96
    %v362 = vunpack.c.h.b16 %v96
    %v363 = vunpack.c.l.b16 %v97
    %v364 = vunpack.c.h.b16 %v97
    %v365 = vunpack.c.l.b16 %v98
    %v366 = vunpack.c.h.b16 %v98
    %v367 = vunpack.c.l.b16 %v99
    %v368 = vunpack.c.h.b16 %v99
    %v369 = vunpack.c.l.b16 %v100
    %v370 = vunpack.c.h.b16 %v100
    %v371 = vunpack.c.l.b16 %v101
    %v372 = vunpack.c.h.b16 %v101
    %v373 = vunpack.c.l.b16 %v102
    %v374 = vunpack.c.h.b16 %v102
    %v375 = vunpack.c.l.b16 %v103
    %v376 = vunpack.c.h.b16 %v103
    %v377 = vunpack.c.l.b16 %v104
    %v378 = vunpack.c.h.b16 %v104
    %v379 = vunpack.c.l.b16 %v105
    %v380 = vunpack.c.h.b16 %v105
    %v381 = vunpack.c.l.b16 %v106
    %v382 = vunpack.c.h.b16 %v106
    %v383 = vunpack.c.l.b16 %v107
    %v384 = vunpack.c.h.b16 %v107
    %v385 = vunpack.c.l.b16 %v108
    %v386 = vunpack.c.h.b16 %v108
    %v387 = vunpack.c.l.b16 %v109
    %v388 = vunpack.c.h.b16 %v109
    %v389 = vunpack.c.l.b16 %v110
    %v390 = vunpack.c.h.b16 %v110
    %v391 = vunpack.c.l.b16 %v111
    %v392 = vunpack.c.h.b16 %v111
    %v393 = vunpack.c.l.b16 %v112
    %v394 = vunpack.c.h.b16 %v112
    %v395 = vunpack.c.l.b16 %v113
    %v396 = vunpack.c.h.b16 %v113
    %v397 = vunpack.c.l.b16 %v114
    %v398 = vunpack.c.h.b16 %v114
    %v399 = vunpack.c.l.b16 %v115
    %v400 = vunpack.c.h.b16 %v115
    %v401 = vunpack.c.l.b16 %v116
    %v402 = vunpack.c.h.b16 %v116
    %v403 = vunpack.c.l.b16 %v117
    %v404 = vunpack.c.h.b16 %v117
    %v405 = vunpack.c.l.b16 %v118
    %v406 = vunpack.c.h.b16 %v118
    %v407 = vunpack.c.l.b16 %v119
    %v408 = vunpack.c.h.b16 %v119
    %v409 = vunpack.c.l.b16 %v120
    %v410 = vunpack.c.h.b16 %v120
    %v411 = vunpack.c.l.b16 %v121
    %v412 = vunpack.c.h.b16 %v121
    %v413 = vunpack.c.l.b16 %v122
    %v414 = vunpack.c.h.b16 %v122
    %v415 = vunpack.c.l.b16 %v123
    %v416 = vunpack.c.h.b16 %v123
    %v417 = vunpack.c.l.b16 %v124
    %v418 = vunpack.c.h.b16 %v124
    %v419 = vunpack.c.l.b16 %v125
    %v420 = vunpack.c.h.b16 %v125
    %v421 = vunpack.c.l.b16 %v126
    %v422 = vunpack.c.h.b16 %v126
    %v423 = vunpack.c.l.b16 %v127
    %v424 = vunpack.c.h.b16 %v127
    %v425 = vunpack.c.l.b16 %v128
    %v426 = vunpack.c.h.b16 %v128
    %v427 = vunpack.c.l.b16 %v129
    %v428 = vunpack.c.h.b16 %v129
    %v429 = vunpack.c.l.b16 %v130
    %v430 = vunpack.c.h.b16 %v130
    %v431 = vunpack.c.l.b16 %v131
    %v432 = vunpack.c.h.b16 %v131
    %v433 = vunpack.c.l.b16 %v132
    %v434 = vunpack.c.h.b16 %v132
    %v435 = vunpack.c.l.b16 %v133
    %v436 = vunpack.c.h.b16 %v133
    %v437 = vunpack.c.l.b16 %v134
    %v438 = vunpack.c.h.b16 %v134
    %v439 = vunpack.c.l.b16 %v135
    %v440 = vunpack.c.h.b16 %v135
    %v441 = vunpack.c.l.b16 %v136
    %v442 = vunpack.c.h.b16 %v136
    %v443 = vunpack.c.l.b16 %v137
    %v444 = vunpack.c.h.b16 %v137
    %v445 = vunpack.c.l.b16 %v138
    %v446 = vunpack.c.h.b16 %v138
    %v447 = vunpack.c.l.b16 %v139
    %v448 = vunpack.c.h.b16 %v139
    %v449 = vunpack.c.l.b16 %v140
    %v450 = vunpack.c.h.b16 %v140
    %v451 = vunpack.c.l.b16 %v141
    %v452 = vunpack.c.h.b16 %v141
    %v453 = vunpack.c.l.b16 %v142
    %v454 = vunpack.c.h.b16 %v142
    %v455 = vunpack.c.l.b16 %v143
    %v456 = vunpack.c.h.b16 %v143
    %v457 = vunpack.c.l.b16 %v144
    %v458 = vunpack.c.h.b16 %v144
    %v459 = vunpack.c.l.b16 %v145
    %v460 = vunpack.c.h.b16 %v145
    %v461 = vunpack.c.l.b16 %v146
    %v462 = vunpack.c.h.b16 %v146
    %v463 = vunpack.c.l.b16 %v147
    %v464 = vunpack.c.h.b16 %v147
    %v465 = vunpack.c.l.b16 %v148
    %v466 = vunpack.c.h.b16 %v148
    %v467 = vunpack.c.l.b16 %v149
    %v468 = vunpack.c.h.b16 %v149
    %v469 = vunpack.c.l.b16 %v150
    %v470 = vunpack.c.h.b16 %v150
    %v471 = vunpack.c.l.b16 %v151
    %v472 = vunpack.c.h.b16 %v151
    %v473 = vunpack.c.l.b16 %v152
    %v474 = vunpack.c.h.b16 %v152
    %v475 = vunpack.c.l.b16 %v153
    %v476 = vunpack.c.h.b16 %v153
    %v477 = vunpack.c.l.b16 %v154
    %v478 = vunpack.c.h.b16 %v154
    %v479 = vunpack.c.l.b16 %v155
    %v480 = vunpack.c.h.b16 %v155
    %v481 = vunpack.c.l.b16 %v156
    %v482 = vunpack.c.h.b16 %v156
    %v483 = vunpack.c.l.b16 %v157
    %v484 = vunpack.c.h.b16 %v157
    %v485 = vunpack.c.l.b16 %v158
    %v486 = vunpack.c.h.b16 %v158
    %v487 = vunpack.c.l.b16 %v159
    %v488 = vunpack.c.h.b16 %v159
    %v489 = vunpack.c.l.b16 %v160
    %v490 = vunpack.c.h.b16 %v160
    %v491 = vunpack.c.l.b16 %v161
    %v492 = vunpack.c.h.b16 %v161
    %v493 = vunpack.c.l.b16 %v162
    %v494 = vunpack.c.h.b16 %v162
    %v495 = vunpack.c.l.b16 %v163
    %v496 = vunpack.c.h.b16 %v163
    %v497 = vunpack.c.l.b16 %v164
    %v498 = vunpack.c.h.b16 %v164
    %v499 = vunpack.c.l.b16 %v165
    %v500 = vunpack.c.h.b16 %v165
    %v501 = vunpack.c.l.b16 %v166
    %v502 = vunpack.c.h.b16 %v166
    %v503 = vunpack.c.l.b16 %v167
    %v504 = vunpack.c.h.b16 %v167
    %v505 = vunpack.c.l.b16 %v168
    %v506 = vunpack.c.h.b16 %v168
    %v507 = vunpack.c.l.b16 %v169
    %v508 = vunpack.c.h.b16 %v169
    %v509 = vunpack.c.l.b16 %v170
    %v510 = vunpack.c.h.b16 %v170
    %v511 = vunpack.c.l.b16 %v171
    %v512 = vunpack.c.h.b16 %v171
    %v513 = vunpack.c.l.b16 %v172
    %v514 = vunpack.c.h.b16 %v172
    %v515 = vunpack.c.l.b16 %v173
    %v516 = vunpack.c.h.b16 %v173
    %v517 = vunpack.c.l.b16 %v174
    %v518 = vunpack.c.h.b16 %v174
    %v519 = vunpack.c.l.b16 %v175
    %v520 = vunpack.c.h.b16 %v175
    %v521 = vunpack.c.l.b16 %v176
    %v522 = vunpack.c.h.b16 %v176
    %v523 = vunpack.c.l.b16 %v177
    %v524 = vunpack.c.h.b16 %v177
    %v525 = vunpack.c.l.b16 %v178
    %v526 = vunpack.c.h.b16 %v178
    %v527 = vunpack.c.l.b16 %v179
    %v528 = vunpack.c.h.b16 %v179
    %v529 = vunpack.c.l.b16 %v180
    %v530 = vunpack.c.h.b16 %v180
    %v531 = vunpack.c.l.b16 %v181
    %v532 = vunpack.c.h.b16 %v181
    %v533 = vunpack.c.l.b16 %v182
    %v534 = vunpack.c.h.b16 %v182
    %v535 = vunpack.c.l.b16 %v183
    %v536 = vunpack.c.h.b16 %v183
    %v537 = vunpack.c.l.b16 %v184
    %v538 = vunpack.c.h.b16 %v184
    %v539 = vunpack.c.l.b16 %v185
    %v540 = vunpack.c.h.b16 %v185
    %v541 = vunpack.c.l.b16 %v186
    %v542 = vunpack.c.h.b16 %v186
    %v543 = vunpack.c.l.b16 %v187
    %v544 = vunpack.c.h.b16 %v187
    %v545 = vunpack.c.l.b16 %v188
    %v546 = vunpack.c.h.b16 %v188
    %v547 = vunpack.c.l.b16 %v189
    %v548 = vunpack.c.h.b16 %v189
    %v549 = vunpack.c.l.b16 %v190
    %v550 = vunpack.c.h.b16 %v190
    %v551 = vunpack.c.l.b16 %v191
    %v552 = vunpack.c.h.b16 %v191
    %v553 = vunpack.c.l.b16 %v192
    %v554 = vunpack.c.h.b16 %v192
    %v555 = vunpack.c.l.b16 %v193
    %v556 = vunpack.c.h.b16 %v193
    %v557 = vunpack.c.l.b16 %v194
    %v558 = vunpack.c.h.b16 %v194
    %v559 = vunpack.c.l.b16 %v195
    %v560 = vunpack.c.h.b16 %v195
    %v561 = vunpack.c.l.b16 %v196
    %v562 = vunpack.c.h.b16 %v196
    %v563 = vunpack.c.l.b16 %v197
    %v564 = vunpack.c.h.b16 %v197
    %v565 = vunpack.c.l.b16 %v198
    %v566 = vunpack.c.h.b16 %v198
    %v567 = vunpack.c.l.b16 %v199
    %v568 = vunpack.c.h.b16 %v199
    %v569 = vunpack.c.l.b16 %v200
    %v570 = vunpack.c.h.b16 %v200
    %v571 = vunpack.c.l.b16 %v201
    %v572 = vunpack.c.h.b16 %v201
    %v573 = vunpack.c.l.b16 %v202
    %v574 = vunpack.c.h.b16 %v202
    %v575 = vunpack.c.l.b16 %v203
    %v576 = vunpack.c.h.b16 %v203
    %v577 = vunpack.c.l.b16 %v204
    %v578 = vunpack.c.h.b16 %v204
    %v579 = vunpack.c.l.b16 %v205
    %v580 = vunpack.c.h.b16 %v205
    %v581 = vunpack.c.l.b16 %v206
    %v582 = vunpack.c.h.b16 %v206
    %v583 = vunpack.c.l.b16 %v207
    %v584 = vunpack.c.h.b16 %v207
    %v585 = vunpack.c.l.b16 %v208
    %v586 = vunpack.c.h.b16 %v208
    %v587 = vunpack.c.l.b16 %v209
    %v588 = vunpack.c.h.b16 %v209
    %v589 = vunpack.c.l.b16 %v210
    %v590 = vunpack.c.h.b16 %v210
    %v591 = vunpack.c.l.b16 %v211
    %v592 = vunpack.c.h.b16 %v211
    %v593 = vunpack.c.l.b16 %v212
    %v594 = vunpack.c.h.b16 %v212
    %v595 = vunpack.c.l.b16 %v213
    %v596 = vunpack.c.h.b16 %v213
    %v597 = vunpack.c.l.b16 %v214
    %v598 = vunpack.c.h.b16 %v214
    %v599 = vunpack.c.l.b16 %v215
    %v600 = vunpack.c.h.b16 %v215
    %v601 = vunpack.c.l.b16 %v216
    %v602 = vunpack.c.h.b16 %v216
    %v603 = vunpack.c.l.b16 %v217
    %v604 = vunpack.c.h.b16 %v217
    %v605 = vunpack.c.l.b16 %v218
    %v606 = vunpack.c.h.b16 %v218
    %v607 = vunpack.c.l.b16 %v219
    %v608 = vunpack.c.h.b16 %v219
    %v609 = vunpack.c.l.b16 %v220
    %v610 = vunpack.c.h.b16 %v220
    %v611 = vpack.c.b16 %v357, %v355
    %v612 = vpack.c.b16 %v358, %v356
    %v613 = vpack.c.b16 %v361, %v359
    %v614 = vpack.c.b16 %v362, %v360
    %v615 = vpack.c.b16 %v365, %v363
    %v616 = vpack.c.b16 %v366, %v364
    %v617 = vpack.c.b16 %v369, %v367
    %v618 = vpack.c.b16 %v370, %v368
    %v619 = vpack.c.b16 %v373, %v371
    %v620 = vpack.c.b16 %v374, %v372
    %v621 = vpack.c.b16 %v377, %v375
    %v622 = vpack.c.b16 %v378, %v376
    %v623 = vpack.c.b16 %v381, %v379
    %v624 = vpack.c.b16 %v382, %v380
    %v625 = vpack.c.b16 %v385, %v383
    %v626 = vpack.c.b16 %v386, %v384
    %v627 = vpack.c.b16 %v389, %v387
    %v628 = vpack.c.b16 %v390, %v388
    %v629 = vpack.c.b16 %v393, %v391
    %v630 = vpack.c.b16 %v394, %v392
    %v631 = vpack.c.b16 %v397, %v395
    %v632 = vpack.c.b16 %v398, %v396
    %v633 = vpack.c.b16 %v401, %v399
    %v634 = vpack.c.b16 %v402, %v400
    %v635 = vpack.c.b16 %v405, %v403
    %v636 = vpack.c.b16 %v406, %v404
    %v637 = vpack.c.b16 %v409, %v407
    %v638 = vpack.c.b16 %v410, %v408
    %v639 = vpack.c.b16 %v413, %v411
    %v640 = vpack.c.b16 %v414, %v412
    %v641 = vpack.c.b16 %v417, %v415
    %v642 = vpack.c.b16 %v418, %v416
    %v643 = vpack.c.b16 %v421, %v419
    %v644 = vpack.c.b16 %v422, %v420
    %v645 = vpack.c.b16 %v425, %v423
    %v646 = vpack.c.b16 %v426, %v424
    %v647 = vpack.c.b16 %v429, %v427
    %v648 = vpack.c.b16 %v430, %v428
    %v649 = vpack.c.b16 %v433, %v431
    %v650 = vpack.c.b16 %v434, %v432
    %v651 = vpack.c.b16 %v437, %v435
    %v652 = vpack.c.b16 %v438, %v436
    %v653 = vpack.c.b16 %v441, %v439
    %v654 = vpack.c.b16 %v442, %v440
    %v655 = vpack.c.b16 %v445, %v443
    %v656 = vpack.c.b16 %v446, %v444
    %v657 = vpack.c.b16 %v449, %v447
    %v658 = vpack.c.b16 %v450, %v448
    %v659 = vpack.c.b16 %v453, %v451
    %v660 = vpack.c.b16 %v454, %v452
    %v661 = vpack.c.b16 %v457, %v455
    %v662 = vpack.c.b16 %v458, %v456
    %v663 = vpack.c.b16 %v461, %v459
    %v664 = vpack.c.b16 %v462, %v460
    %v665 = vpack.c.b16 %v465, %v463
    %v666 = vpack.c.b16 %v466, %v464
    %v667 = vpack.c.b16 %v469, %v467
    %v668 = vpack.c.b16 %v470, %v468
    %v669 = vpack.c.b16 %v473, %v471
    %v670 = vpack.c.b16 %v474, %v472
    %v671 = vpack.c.b16 %v477, %v475
    %v672 = vpack.c.b16 %v478, %v476
    %v673 = vpack.c.b16 %v481, %v479
    %v674 = vpack.c.b16 %v482, %v480
    %v675 = vpack.c.b16 %v485, %v483
    %v676 = vpack.c.b16 %v486, %v484
    %v677 = vpack.c.b16 %v489, %v487
    %v678 = vpack.c.b16 %v490, %v488
    %v679 = vpack.c.b16 %v493, %v491
    %v680 = vpack.c.b16 %v494, %v492
    %v681 = vpack.c.b16 %v497, %v495
    %v682 = vpack.c.b16 %v498, %v496
    %v683 = vpack.c.b16 %v501, %v499
    %v684 = vpack.c.b16 %v502, %v500
    %v685 = vpack.c.b16 %v505, %v503
    %v686 = vpack.c.b16 %v506, %v504
    %v687 = vpack.c.b16 %v509, %v507
    %v688 = vpack.c.b16 %v510, %v508
    %v689 = vpack.c.b16 %v513, %v511
    %v690 = vpack.c.b16 %v514, %v512
    %v691 = vpack.c.b16 %v517, %v515
    %v692 = vpack.c.b16 %v518, %v516
    %v693 = vpack.c.b16 %v521, %v519
    %v694 = vpack.c.b16 %v522, %v520
    %v695 = vpack.c.b16 %v525, %v523
    %v696 = vpack.c.b16 %v526, %v524
    %v697 = vpack.c.b16 %v529, %v527
    %v698 = vpack.c.b16 %v530, %v528
    %v699 = vpack.c.b16 %v533, %v531
    %v700 = vpack.c.b16 %v534, %v532
    %v701 = vpack.c.b16 %v537, %v535
    %v702 = vpack.c.b16 %v538, %v536
    %v703 = vpack.c.b16 %v541, %v539
    %v704 = vpack.c.b16 %v542, %v540
    %v705 = vpack.c.b16 %v545, %v543
    %v706 = vpack.c.b16 %v546, %v544
    %v707 = vpack.c.b16 %v549, %v547
    %v708 = vpack.c.b16 %v550, %v548
    %v709 = vpack.c.b16 %v553, %v551
    %v710 = vpack.c.b16 %v554, %v552
    %v711 = vpack.c.b16 %v557, %v555
    %v712 = vpack.c.b16 %v558, %v556
    %v713 = vpack.c.b16 %v561, %v559
    %v714 = vpack.c.b16 %v562, %v560
    %v715 = vpack.c.b16 %v565, %v563
    %v716 = vpack.c.b16 %v566, %v564
    %v717 = vpack.c.b16 %v569, %v567
    %v718 = vpack.c.b16 %v570, %v568
    %v719 = vpack.c.b16 %v573, %v571
    %v720 = vpack.c.b16 %v574, %v572
    %v721 = vpack.c.b16 %v577, %v575
    %v722 = vpack.c.b16 %v578, %v576
    %v723 = vpack.c.b16 %v581, %v579
    %v724 = vpack.c.b16 %v582, %v580
    %v725 = vpack.c.b16 %v585, %v583
    %v726 = vpack.c.b16 %v586, %v584
    %v727 = vpack.c.b16 %v589, %v587
    %v728 = vpack.c.b16 %v590, %v588
    %v729 = vpack.c.b16 %v593, %v591
    %v730 = vpack.c.b16 %v594, %v592
    %v731 = vpack.c.b16 %v597, %v595
    %v732 = vpack.c.b16 %v598, %v596
    %v733 = vpack.c.b16 %v601, %v599
    %v734 = vpack.c.b16 %v602, %v600
    %v735 = vpack.c.b16 %v605, %v603
    %v736 = vpack.c.b16 %v606, %v604
    %v737 = vpack.c.b16 %v609, %v607
    %v738 = vpack.c.b16 %v610, %v608
    %867 = vmatpush.bf16.msra.mxu0 %v625
    %868 = vmatpush.bf16.msra.mxu0 %v623
    %869 = vmatpush.bf16.msra.mxu0 %v621
    %870 = vmatpush.bf16.msra.mxu0 %v619
    %871 = vmatpush.bf16.msra.mxu0 %v617
    %872 = vmatpush.bf16.msra.mxu0 %v615
    %873 = vmatpush.bf16.msra.mxu0 %v613
    %874 = vmatpush.bf16.msra.mxu0 %v611
    %875 = vmatmul.bf16.gmra.mxu0 %v85
    %v876 = vpop.f32.mrf.mxu0
    %v877 = vadd.f32 %v223, %v876
    %v878 = vpop.f32.mrf.mxu0
    %879 = vdwg.mxu0
    %880 = vmatpush.bf16.msra.mxu0 %v641
    %881 = vmatpush.bf16.msra.mxu0 %v639
    %882 = vmatpush.bf16.msra.mxu0 %v637
    %883 = vmatpush.bf16.msra.mxu0 %v635
    %884 = vmatpush.bf16.msra.mxu0 %v633
    %885 = vmatpush.bf16.msra.mxu0 %v631
    %886 = vmatpush.bf16.msra.mxu0 %v629
    %887 = vmatpush.bf16.msra.mxu0 %v627
    %888 = vmatmul.bf16.gmra.mxu0 %v86
    %v889 = vpop.f32.mrf.mxu0
    %v890 = vadd.f32 %v877, %v889
    %v891 = vpop.f32.mrf.mxu0
    %892 = vdwg.mxu0
    %893 = vmatpush.bf16.msra.mxu0 %v657
    %894 = vmatpush.bf16.msra.mxu0 %v655
    %895 = vmatpush.bf16.msra.mxu0 %v653
    %896 = vmatpush.bf16.msra.mxu0 %v651
    %897 = vmatpush.bf16.msra.mxu0 %v649
    %898 = vmatpush.bf16.msra.mxu0 %v647
    %899 = vmatpush.bf16.msra.mxu0 %v645
    %900 = vmatpush.bf16.msra.mxu0 %v643
    %901 = vmatmul.bf16.gmra.mxu0 %v87
    %v902 = vpop.f32.mrf.mxu0
    %v903 = vadd.f32 %v890, %v902
    %v904 = vpop.f32.mrf.mxu0
    %905 = vdwg.mxu0
    %906 = vmatpush.bf16.msra.mxu0 %v673
    %907 = vmatpush.bf16.msra.mxu0 %v671
    %908 = vmatpush.bf16.msra.mxu0 %v669
    %909 = vmatpush.bf16.msra.mxu0 %v667
    %910 = vmatpush.bf16.msra.mxu0 %v665
    %911 = vmatpush.bf16.msra.mxu0 %v663
    %912 = vmatpush.bf16.msra.mxu0 %v661
    %913 = vmatpush.bf16.msra.mxu0 %v659
    %914 = vmatmul.bf16.gmra.mxu0 %v88
    %v915 = vpop.f32.mrf.mxu0
    %v916 = vadd.f32 %v903, %v915
    %v917 = vpop.f32.mrf.mxu0
    %918 = vdwg.mxu0
    %919 = vmatpush.bf16.msra.mxu0 %v689
    %920 = vmatpush.bf16.msra.mxu0 %v687
    %921 = vmatpush.bf16.msra.mxu0 %v685
    %922 = vmatpush.bf16.msra.mxu0 %v683
    %923 = vmatpush.bf16.msra.mxu0 %v681
    %924 = vmatpush.bf16.msra.mxu0 %v679
    %925 = vmatpush.bf16.msra.mxu0 %v677
    %926 = vmatpush.bf16.msra.mxu0 %v675
    %927 = vmatmul.bf16.gmra.mxu0 %v89
    %v928 = vpop.f32.mrf.mxu0
    %v929 = vadd.f32 %v916, %v928
    %v930 = vpop.f32.mrf.mxu0
    %931 = vdwg.mxu0
    %932 = vmatpush.bf16.msra.mxu0 %v705
    %933 = vmatpush.bf16.msra.mxu0 %v703
    %934 = vmatpush.bf16.msra.mxu0 %v701
    %935 = vmatpush.bf16.msra.mxu0 %v699
    %936 = vmatpush.bf16.msra.mxu0 %v697
    %937 = vmatpush.bf16.msra.mxu0 %v695
    %938 = vmatpush.bf16.msra.mxu0 %v693
    %939 = vmatpush.bf16.msra.mxu0 %v691
    %940 = vmatmul.bf16.gmra.mxu0 %v90
    %v941 = vpop.f32.mrf.mxu0
    %v942 = vadd.f32 %v929, %v941
    %v943 = vpop.f32.mrf.mxu0
    %944 = vdwg.mxu0
    %945 = vmatpush.bf16.msra.mxu0 %v721
    %946 = vmatpush.bf16.msra.mxu0 %v719
    %947 = vmatpush.bf16.msra.mxu0 %v717
    %948 = vmatpush.bf16.msra.mxu0 %v715
    %949 = vmatpush.bf16.msra.mxu0 %v713
    %950 = vmatpush.bf16.msra.mxu0 %v711
    %951 = vmatpush.bf16.msra.mxu0 %v709
    %952 = vmatpush.bf16.msra.mxu0 %v707
    %953 = vmatmul.bf16.gmra.mxu0 %v91
    %v954 = vpop.f32.mrf.mxu0
    %v955 = vadd.f32 %v942, %v954
    %v956 = vpop.f32.mrf.mxu0
    %957 = vdwg.mxu0
    %958 = vmatpush.bf16.msra.mxu0 %v737
    %959 = vmatpush.bf16.msra.mxu0 %v735
    %960 = vmatpush.bf16.msra.mxu0 %v733
    %961 = vmatpush.bf16.msra.mxu0 %v731
    %962 = vmatpush.bf16.msra.mxu0 %v729
    %963 = vmatpush.bf16.msra.mxu0 %v727
    %964 = vmatpush.bf16.msra.mxu0 %v725
    %965 = vmatpush.bf16.msra.mxu0 %v723
    %966 = vmatmul.bf16.gmra.mxu0 %v92
    %v967 = vpop.f32.mrf.mxu0
    %v968 = vadd.f32 %v955, %v967
    %v969 = vpop.f32.mrf.mxu0
    %970 = vdwg.mxu0
    %971 = vmatpush.bf16.msra.mxu0 %v626
    %972 = vmatpush.bf16.msra.mxu0 %v624
    %973 = vmatpush.bf16.msra.mxu0 %v622
    %974 = vmatpush.bf16.msra.mxu0 %v620
    %975 = vmatpush.bf16.msra.mxu0 %v618
    %976 = vmatpush.bf16.msra.mxu0 %v616
    %977 = vmatpush.bf16.msra.mxu0 %v614
    %978 = vmatpush.bf16.msra.mxu0 %v612
    %979 = vmatmul.bf16.gmra.mxu0 %v85
    %v980 = vpop.f32.mrf.mxu0
    %v981 = vadd.f32 %v224, %v980
    %v982 = vpop.f32.mrf.mxu0
    %983 = vdwg.mxu0
    %984 = vmatpush.bf16.msra.mxu0 %v642
    %985 = vmatpush.bf16.msra.mxu0 %v640
    %986 = vmatpush.bf16.msra.mxu0 %v638
    %987 = vmatpush.bf16.msra.mxu0 %v636
    %988 = vmatpush.bf16.msra.mxu0 %v634
    %989 = vmatpush.bf16.msra.mxu0 %v632
    %990 = vmatpush.bf16.msra.mxu0 %v630
    %991 = vmatpush.bf16.msra.mxu0 %v628
    %992 = vmatmul.bf16.gmra.mxu0 %v86
    %v993 = vpop.f32.mrf.mxu0
    %v994 = vadd.f32 %v981, %v993
    %v995 = vpop.f32.mrf.mxu0
    %996 = vdwg.mxu0
    %997 = vmatpush.bf16.msra.mxu0 %v658
    %998 = vmatpush.bf16.msra.mxu0 %v656
    %999 = vmatpush.bf16.msra.mxu0 %v654
    %1000 = vmatpush.bf16.msra.mxu0 %v652
    %1001 = vmatpush.bf16.msra.mxu0 %v650
    %1002 = vmatpush.bf16.msra.mxu0 %v648
    %1003 = vmatpush.bf16.msra.mxu0 %v646
    %1004 = vmatpush.bf16.msra.mxu0 %v644
    %1005 = vmatmul.bf16.gmra.mxu0 %v87
    %v1006 = vpop.f32.mrf.mxu0
    %v1007 = vadd.f32 %v994, %v1006
    %v1008 = vpop.f32.mrf.mxu0
    %1009 = vdwg.mxu0
    %1010 = vmatpush.bf16.msra.mxu0 %v674
    %1011 = vmatpush.bf16.msra.mxu0 %v672
    %1012 = vmatpush.bf16.msra.mxu0 %v670
    %1013 = vmatpush.bf16.msra.mxu0 %v668
    %1014 = vmatpush.bf16.msra.mxu0 %v666
    %1015 = vmatpush.bf16.msra.mxu0 %v664
    %1016 = vmatpush.bf16.msra.mxu0 %v662
    %1017 = vmatpush.bf16.msra.mxu0 %v660
    %1018 = vmatmul.bf16.gmra.mxu0 %v88
    %v1019 = vpop.f32.mrf.mxu0
    %v1020 = vadd.f32 %v1007, %v1019
    %v1021 = vpop.f32.mrf.mxu0
    %1022 = vdwg.mxu0
    %1023 = vmatpush.bf16.msra.mxu0 %v690
    %1024 = vmatpush.bf16.msra.mxu0 %v688
    %1025 = vmatpush.bf16.msra.mxu0 %v686
    %1026 = vmatpush.bf16.msra.mxu0 %v684
    %1027 = vmatpush.bf16.msra.mxu0 %v682
    %1028 = vmatpush.bf16.msra.mxu0 %v680
    %1029 = vmatpush.bf16.msra.mxu0 %v678
    %1030 = vmatpush.bf16.msra.mxu0 %v676
    %1031 = vmatmul.bf16.gmra.mxu0 %v89
    %v1032 = vpop.f32.mrf.mxu0
    %v1033 = vadd.f32 %v1020, %v1032
    %v1034 = vpop.f32.mrf.mxu0
    %1035 = vdwg.mxu0
    %1036 = vmatpush.bf16.msra.mxu0 %v706
    %1037 = vmatpush.bf16.msra.mxu0 %v704
    %1038 = vmatpush.bf16.msra.mxu0 %v702
    %1039 = vmatpush.bf16.msra.mxu0 %v700
    %1040 = vmatpush.bf16.msra.mxu0 %v698
    %1041 = vmatpush.bf16.msra.mxu0 %v696
    %1042 = vmatpush.bf16.msra.mxu0 %v694
    %1043 = vmatpush.bf16.msra.mxu0 %v692
    %1044 = vmatmul.bf16.gmra.mxu0 %v90
    %v1045 = vpop.f32.mrf.mxu0
    %v1046 = vadd.f32 %v1033, %v1045
    %v1047 = vpop.f32.mrf.mxu0
    %1048 = vdwg.mxu0
    %1049 = vmatpush.bf16.msra.mxu0 %v722
    %1050 = vmatpush.bf16.msra.mxu0 %v720
    %1051 = vmatpush.bf16.msra.mxu0 %v718
    %1052 = vmatpush.bf16.msra.mxu0 %v716
    %1053 = vmatpush.bf16.msra.mxu0 %v714
    %1054 = vmatpush.bf16.msra.mxu0 %v712
    %1055 = vmatpush.bf16.msra.mxu0 %v710
    %1056 = vmatpush.bf16.msra.mxu0 %v708
    %1057 = vmatmul.bf16.gmra.mxu0 %v91
    %v1058 = vpop.f32.mrf.mxu0
    %v1059 = vadd.f32 %v1046, %v1058
    %v1060 = vpop.f32.mrf.mxu0
    %1061 = vdwg.mxu0
    %1062 = vmatpush.bf16.msra.mxu0 %v738
    %1063 = vmatpush.bf16.msra.mxu0 %v736
    %1064 = vmatpush.bf16.msra.mxu0 %v734
    %1065 = vmatpush.bf16.msra.mxu0 %v732
    %1066 = vmatpush.bf16.msra.mxu0 %v730
    %1067 = vmatpush.bf16.msra.mxu0 %v728
    %1068 = vmatpush.bf16.msra.mxu0 %v726
    %1069 = vmatpush.bf16.msra.mxu0 %v724
    %1070 = vmatmul.bf16.gmra.mxu0 %v92
    %v1071 = vpop.f32.mrf.mxu0
    %v1072 = vadd.f32 %v1059, %v1071
    %v1073 = vpop.f32.mrf.mxu0
    %1074 = vdwg.mxu0
    %v1075 = vmax.f32 %v968, 0.0
    %v1076 = vmax.f32 %v1072, 0.0
    %v1077 = vpack.c.bf16 %v1075, %v1075
    %v1078 = vpack.c.bf16 %v1076, %v1076
    %v1079 = vld [vmem:[#allocation7] sm:$0xf]
    %v1080 = vld [vmem:[#allocation7 + $0x4] sm:$0xf]
    %v1081 = vld [vmem:[#allocation7 + $0x8] sm:$0xf]
    %v1082 = vld [vmem:[#allocation7 + $0xc] sm:$0xf]
    %v1083 = vld [vmem:[#allocation7 + $0x10] sm:$0xf]
    %v1084 = vld [vmem:[#allocation7 + $0x14] sm:$0xf]
    %v1085 = vld [vmem:[#allocation7 + $0x18] sm:$0xf]
    %v1086 = vld [vmem:[#allocation7 + $0x1c] sm:$0xf]
    %v1087 = vld [vmem:[#allocation7 + $0x20] sm:$0xf]
    %v1088 = vld [vmem:[#allocation7 + $0x24] sm:$0xf]
    %v1089 = vld [vmem:[#allocation7 + $0x28] sm:$0xf]
    %v1090 = vld [vmem:[#allocation7 + $0x2c] sm:$0xf]
    %v1091 = vld [vmem:[#allocation7 + $0x30] sm:$0xf]
    %v1092 = vld [vmem:[#allocation7 + $0x34] sm:$0xf]
    %v1093 = vld [vmem:[#allocation7 + $0x38] sm:$0xf]
    %v1094 = vld [vmem:[#allocation7 + $0x3c] sm:$0xf]
    %v1095 = vld [vmem:[#allocation7 + $0x40] sm:$0xf]
    %v1096 = vld [vmem:[#allocation7 + $0x44] sm:$0xf]
    %v1097 = vld [vmem:[#allocation7 + $0x48] sm:$0xf]
    %v1098 = vld [vmem:[#allocation7 + $0x4c] sm:$0xf]
    %v1099 = vld [vmem:[#allocation7 + $0x50] sm:$0xf]
    %v1100 = vld [vmem:[#allocation7 + $0x54] sm:$0xf]
    %v1101 = vld [vmem:[#allocation7 + $0x58] sm:$0xf]
    %v1102 = vld [vmem:[#allocation7 + $0x5c] sm:$0xf]
    %v1103 = vld [vmem:[#allocation7 + $0x60] sm:$0xf]
    %v1104 = vld [vmem:[#allocation7 + $0x64] sm:$0xf]
    %v1105 = vld [vmem:[#allocation7 + $0x68] sm:$0xf]
    %v1106 = vld [vmem:[#allocation7 + $0x6c] sm:$0xf]
    %v1107 = vld [vmem:[#allocation7 + $0x70] sm:$0xf]
    %v1108 = vld [vmem:[#allocation7 + $0x74] sm:$0xf]
    %v1109 = vld [vmem:[#allocation7 + $0x78] sm:$0xf]
    %v1110 = vld [vmem:[#allocation7 + $0x7c] sm:$0xf]
    %v1111 = vld [vmem:[#allocation8 + $0x2] sm:$0x1]
    %v1113 = vperm.slane %v1111, 0
    %v1147 = vunpack.c.l.b16 %v1079
    %v1148 = vunpack.c.l.b16 %v1080
    %v1149 = vunpack.c.l.b16 %v1081
    %v1150 = vunpack.c.l.b16 %v1082
    %v1151 = vunpack.c.l.b16 %v1083
    %v1152 = vunpack.c.l.b16 %v1084
    %v1153 = vunpack.c.l.b16 %v1085
    %v1154 = vunpack.c.l.b16 %v1086
    %v1155 = vunpack.c.l.b16 %v1087
    %v1156 = vunpack.c.l.b16 %v1088
    %v1157 = vunpack.c.l.b16 %v1089
    %v1158 = vunpack.c.l.b16 %v1090
    %v1159 = vunpack.c.l.b16 %v1091
    %v1160 = vunpack.c.l.b16 %v1092
    %v1161 = vunpack.c.l.b16 %v1093
    %v1162 = vunpack.c.l.b16 %v1094
    %v1163 = vunpack.c.l.b16 %v1095
    %v1164 = vunpack.c.l.b16 %v1096
    %v1165 = vunpack.c.l.b16 %v1097
    %v1166 = vunpack.c.l.b16 %v1098
    %v1167 = vunpack.c.l.b16 %v1099
    %v1168 = vunpack.c.l.b16 %v1100
    %v1169 = vunpack.c.l.b16 %v1101
    %v1170 = vunpack.c.l.b16 %v1102
    %v1171 = vunpack.c.l.b16 %v1103
    %v1172 = vunpack.c.l.b16 %v1104
    %v1173 = vunpack.c.l.b16 %v1105
    %v1174 = vunpack.c.l.b16 %v1106
    %v1175 = vunpack.c.l.b16 %v1107
    %v1176 = vunpack.c.l.b16 %v1108
    %v1177 = vunpack.c.l.b16 %v1109
    %v1178 = vunpack.c.l.b16 %v1110
    %v1179 = vpack.c.b16 %v1148, %v1147
    %v1180 = vpack.c.b16 %v1150, %v1149
    %v1181 = vpack.c.b16 %v1152, %v1151
    %v1182 = vpack.c.b16 %v1154, %v1153
    %v1183 = vpack.c.b16 %v1156, %v1155
    %v1184 = vpack.c.b16 %v1158, %v1157
    %v1185 = vpack.c.b16 %v1160, %v1159
    %v1186 = vpack.c.b16 %v1162, %v1161
    %v1187 = vpack.c.b16 %v1164, %v1163
    %v1188 = vpack.c.b16 %v1166, %v1165
    %v1189 = vpack.c.b16 %v1168, %v1167
    %v1190 = vpack.c.b16 %v1170, %v1169
    %v1191 = vpack.c.b16 %v1172, %v1171
    %v1192 = vpack.c.b16 %v1174, %v1173
    %v1193 = vpack.c.b16 %v1176, %v1175
    %v1194 = vpack.c.b16 %v1178, %v1177
    %1211 = vmatpush.bf16.msra.mxu0 %v1186
    %1212 = vmatpush.bf16.msra.mxu0 %v1185
    %1213 = vmatpush.bf16.msra.mxu0 %v1184
    %1214 = vmatpush.bf16.msra.mxu0 %v1183
    %1215 = vmatpush.bf16.msra.mxu0 %v1182
    %1216 = vmatpush.bf16.msra.mxu0 %v1181
    %1217 = vmatpush.bf16.msra.mxu0 %v1180
    %1218 = vmatpush.bf16.msra.mxu0 %v1179
    %1219 = vmatmul.bf16.gmra.mxu0 %v1077
    %v1220 = vpop.f32.mrf.mxu0
    %v1221 = vadd.f32 %v1113, %v1220
    %v1222 = vpop.f32.mrf.mxu0
    %1223 = vdwg.mxu0
    %1224 = vmatpush.bf16.msra.mxu0 %v1194
    %1225 = vmatpush.bf16.msra.mxu0 %v1193
    %1226 = vmatpush.bf16.msra.mxu0 %v1192
    %1227 = vmatpush.bf16.msra.mxu0 %v1191
    %1228 = vmatpush.bf16.msra.mxu0 %v1190
    %1229 = vmatpush.bf16.msra.mxu0 %v1189
    %1230 = vmatpush.bf16.msra.mxu0 %v1188
    %1231 = vmatpush.bf16.msra.mxu0 %v1187
    %1232 = vmatmul.bf16.gmra.mxu0 %v1078
    %v1233 = vpop.f32.mrf.mxu0
    %v1234 = vadd.f32 %v1221, %v1233
    %v1235 = vpop.f32.mrf.mxu0
    %1236 = vdwg.mxu0
    %v1237 = vxor.u32 %v1234, 2147483648
    %v1238 = vmul.f32 %v1237, 1.442695
    %v1239 = vpow.pop %v1238
    %v1240 = vadd.f32 %v1239, 1.0
    %v1241 = vrcp.pop %v1240
    %v1242 = vmul.f32 %v1240, %v1241
    %v1243 = vsub.f32 1.0, %v1242
    %v1244 = vmul.f32 %v1241, %v1243
    %v1245 = vadd.f32 %v1241, %v1244
    %vm1246 = vweird.f32 %v1240
    %vm1247 = vweird.f32 %v1241
    %vm1248 = vmor %vm1246, %vm1247
    %v1249 = vsel %vm1248, %v1241, %v1245
    %v1250 = vand.u32 2147483647, %v1240
    %vm1251 = vcmp.eq.f32.partialorder %v1250, 8.507059e+37
    %v1252 = vand.u32 %v1240, 2147483648
    %v1253 = vor.u32 1.1754944e-38, %v1252
    %v1254 = vsel %vm1251, %v1253, %v1249
    %v1255 = vmul.f32 1.0, %v1254
    %v1256 = vpack.c.bf16 %v1255, %v1255
    %1257 = vst [vmem:[#allocation10] sm:$0xf] %v1256
    // Predicated region
    $region34: #{tpu_custom_call.1} parent=1 // pred_check
      _
    $region35: #{tpu_custom_call.1} parent=1 // pred_check_branch
      %1259 = sbr.rel (0) target = $region37
    $region36: #{tpu_custom_call.1} parent=1 // pred_region
      %1261 = vsyncadd [#allocation4], 0
      %s1263 = sshll.u32 [#allocation10], 4
      %s1264 = int_to_ptr.vmem [resolvable:$true] %s1263
      %s1265 = sshll.u32 %s4, 4
      %s1266 = int_to_ptr.hbm [resolvable:$true] %s1265
      %1268 = dma.vmem_to_hbm [thread:$0]  %s1264, 64, %s1266, [#allocation4]
    $region37: #{tpu_custom_call.1} parent=1 // pred_fallthru
      _
    // Predicated region
    $region38: #{tpu_custom_call.1} parent=1 // pred_check
      _
    $region39: #{tpu_custom_call.1} parent=1 // pred_check_branch
      %1270 = sbr.rel (0) target = $region41
    $region40: #{tpu_custom_call.1} parent=1 // pred_region
      %1272 = dma.done [#allocation4], 64
    $region41: #{tpu_custom_call.1} parent=1 // pred_fallthru
      _
    %1273 = vsyncpa [#allocation3], 1
    %1274 = vsyncpa [#allocation6], 1
    %1275 = vsyncpa [#allocation9], 1
    %1276 = vsyncpa [#allocation4], 1

</llo_original>
